<compile_context>
chip_gen: v7x
topology: tpu7x:2x2x1
jax: 0.10.0
libtpu: 0.0.40
codegen_flags: <defaults>
</compile_context>

<pallas_src>
import functools

import jax
import jax.numpy as jnp
from jax.experimental import pallas as pl
from jax.experimental.pallas import tpu as pltpu

K = 7
PAD = K // 2


def _spatial_attention_kernel(w_ref, x_ref, o_ref, mxp_ref, avp_ref, attf_ref,
                              *, C, H, W):
    # x_ref block : (1, C, H*W) in VMEM (lane-dense layout).
    # w_ref       : flat (2*K*K,) conv weights in SMEM
    #               ([max-channel weights | avg-channel weights], each ki-major).
    # mxp_ref/avp_ref : (H+2*PAD, W+2*PAD) f32 scratch (zero-padded pooled maps).
    # attf_ref    : (1, H*W) f32 scratch for the flattened attention map.
    x = x_ref[0]                                          # (C, HW)
    xf = x.astype(jnp.float32)

    # ---- channel pooling (lane-dense VPU work + one sublane reduce) ------
    mx = jnp.max(xf, axis=0, keepdims=True)               # (1, HW)
    av = jnp.sum(xf, axis=0, keepdims=True) * (1.0 / C)   # (1, HW)

    # ---- scatter pooled maps into zero-padded 2D scratch -----------------
    # Scratch is zeroed every grid step: it is per-core and tiny (~2 KiB), and
    # this stays correct when the batch axis is sharded across TensorCores.
    mxp_ref[...] = jnp.zeros_like(mxp_ref)
    avp_ref[...] = jnp.zeros_like(avp_ref)
    for h in range(H):
        mxp_ref[PAD + h:PAD + h + 1, PAD:PAD + W] = mx[:, h * W:(h + 1) * W]
        avp_ref[PAD + h:PAD + h + 1, PAD:PAD + W] = av[:, h * W:(h + 1) * W]

    P = mxp_ref[...]                                      # (Hp, Wp)
    A = avp_ref[...]

    # ---- 7x7 conv over the 2 pooled channels -----------------------------
    # Hoist all 98 scalar weight reads out of the unrolled loops.
    wm = [w_ref[ki * K + kj] for ki in range(K) for kj in range(K)]
    wa = [w_ref[K * K + ki * K + kj] for ki in range(K) for kj in range(K)]

    # 7 lane-shifted slices per pooled map (instead of 98 unaligned 2D slices).
    SP = [P[:, kj:kj + W] for kj in range(K)]             # each (Hp, W)
    SA = [A[:, kj:kj + W] for kj in range(K)]

    rows = []
    for ki in range(K):
        # Two independent accumulator chains of pure VPU mul/add.
        r0 = SP[0] * wm[ki * K + 0] + SA[0] * wa[ki * K + 0]
        r1 = SP[1] * wm[ki * K + 1] + SA[1] * wa[ki * K + 1]
        for kj in range(2, K, 2):
            r0 = r0 + SP[kj] * wm[ki * K + kj] + SA[kj] * wa[ki * K + kj]
        for kj in range(3, K, 2):
            r1 = r1 + SP[kj] * wm[ki * K + kj] + SA[kj] * wa[ki * K + kj]
        rows.append(r0 + r1)                              # (Hp, W)

    # Combine the 7 row offsets with sublane-only shifts, tree-summed.
    acc01 = rows[0][0:H, :] + rows[1][1:1 + H, :]
    acc23 = rows[2][2:2 + H, :] + rows[3][3:3 + H, :]
    acc45 = rows[4][4:4 + H, :] + rows[5][5:5 + H, :]
    acc = (acc01 + acc23) + (acc45 + rows[6][6:6 + H, :])  # (H, W)

    # ---- sigmoid (EUP) on the small 2D tile, then lane-dense flatten ------
    # sigmoid(z) == 0.5*tanh(z/2) + 0.5: exact and overflow-free.
    att2d = 0.5 * jnp.tanh(0.5 * acc) + 0.5               # (H, W)
    for h in range(H):
        attf_ref[:, h * W:(h + 1) * W] = att2d[h:h + 1, :]

    # ---- lane-dense broadcast multiply + store ----------------------------
    o_ref[0] = (xf * attf_ref[...]).astype(o_ref.dtype)


def spatial_attention(x, w):
    """x: (B, C, H, W) float32, w: (2, K, K) float32 conv weight (no bias)."""
    B, C, H, W = x.shape
    HW = H * W
    Hp, Wp = H + 2 * PAD, W + 2 * PAD
    x_flat = x.reshape(B, C, HW)                 # free, contiguous reshape
    w_flat = w.reshape(-1).astype(jnp.float32)

    kernel = functools.partial(_spatial_attention_kernel, C=C, H=H, W=W)
    out_flat = pl.pallas_call(
        kernel,
        out_shape=jax.ShapeDtypeStruct((B, C, HW), x.dtype),
        grid_spec=pltpu.PrefetchScalarGridSpec(
            num_scalar_prefetch=0,
            grid=(B,),
            in_specs=[
                # Untiled SMEM operand: placed once, no per-grid-step re-copy.
                pl.BlockSpec(memory_space=pltpu.MemorySpace.SMEM),
                pl.BlockSpec((1, C, HW), lambda b: (b, 0, 0)),
            ],
            out_specs=pl.BlockSpec((1, C, HW), lambda b: (b, 0, 0)),
            scratch_shapes=[
                pltpu.VMEM((Hp, Wp), jnp.float32),   # padded max-pool map
                pltpu.VMEM((Hp, Wp), jnp.float32),   # padded avg-pool map
                pltpu.VMEM((1, HW), jnp.float32),    # flattened attention map
            ],
        ),
        compiler_params=pltpu.CompilerParams(
            dimension_semantics=("parallel",),
        ),
    )(w_flat, x_flat)
    # TODO(synk): for production-scale C*H*W (e.g. C=512 @ 56x56) add a C-tile
    # grid axis (pooling-reduction pass + per-C-tile multiply, or split into a
    # pooling kernel and a multiply kernel) so per-batch blocks stay within
    # v7x's 64 MiB / v5e's 16 MiB scoped VMEM with double-buffering intact.
    return out_flat.reshape(B, C, H, W)


def _reference(x, w):
    # Pure-JAX reference reproducing the PyTorch forward.
    mx = jnp.max(x, axis=1, keepdims=True)
    av = jnp.mean(x, axis=1, keepdims=True)
    cat = jnp.concatenate([mx, av], axis=1)            # (B, 2, H, W)
    conv = jax.lax.conv_general_dilated(
        cat, w[None],                                  # (1, 2, K, K) OIHW
        window_strides=(1, 1),
        padding=[(PAD, PAD), (PAD, PAD)],
        dimension_numbers=("NCHW", "OIHW", "NCHW"),
    )
    return x * jax.nn.sigmoid(conv)


if __name__ == "__main__":
    B, C, H, W = 2, 4, 16, 16

    key = jax.random.PRNGKey(0)
    kx, kw = jax.random.split(key)
    x = jax.random.normal(kx, (B, C, H, W), dtype=jnp.float32)

    # Deterministic Conv2d(2, 1, 7, bias=False) weight, PyTorch-style uniform
    # bound = 1/sqrt(fan_in) with fan_in = 2*7*7.
    fan_in = 2 * K * K
    bound = 1.0 / jnp.sqrt(jnp.float32(fan_in))
    w = jax.random.uniform(kw, (2, K, K), dtype=jnp.float32,
                           minval=-bound, maxval=bound)

    out = spatial_attention(x, w)
    out = jax.block_until_ready(out)

    ref = _reference(x, w)
    assert out.shape == (B, C, H, W)
    assert jnp.allclose(out, ref, rtol=1e-5, atol=1e-5), "mismatch vs reference"

    print("KERNEL_OK")
</pallas_src>

<mosaic_0001>
module attributes {stable_mosaic.version = 11 : i64} {
  func.func @_spatial_attention_kernel(%arg0: i32, %arg1: memref<98xf32, #tpu.memory_space<smem>>, %arg2: memref<1x4x256xf32, #tpu.memory_space<vmem>>, %arg3: memref<1x4x256xf32, #tpu.memory_space<vmem>>, %arg4: memref<22x22xf32, #tpu.memory_space<vmem>>, %arg5: memref<22x22xf32, #tpu.memory_space<vmem>>, %arg6: memref<1x256xf32, #tpu.memory_space<vmem>>) attributes {dimension_semantics = [#tpu.dimension_semantics<parallel>], iteration_bounds = array<i64: 2>, scalar_prefetch = 0 : i64, scratch_operands = 3 : i64, tpu.core_type = #tpu.core_type<tc>, window_params = [{transform_indices = @transform_0, window_bounds = array<i64: 98>}, {transform_indices = @transform_1, window_bounds = array<i64: 1, 4, 256>}, {transform_indices = @transform_2, window_bounds = array<i64: 1, 4, 256>}]} {
    %c0 = arith.constant 0 : index
    %c0_0 = arith.constant 0 : index
    %c0_1 = arith.constant 0 : index
    %0 = vector.load %arg2[%c0, %c0_0, %c0_1] : memref<1x4x256xf32, #tpu.memory_space<vmem>>, vector<1x4x256xf32>
    %1 = vector.shape_cast %0 : vector<1x4x256xf32> to vector<4x256xf32>
    %cst = arith.constant dense<0xFF800000> : vector<256xf32>
    %2 = vector.multi_reduction <maximumf>, %1, %cst [0] : vector<4x256xf32> to vector<256xf32>
    %3 = vector.shape_cast %2 : vector<256xf32> to vector<1x256xf32>
    %cst_2 = arith.constant dense<0.000000e+00> : vector<256xf32>
    %4 = vector.multi_reduction <add>, %1, %cst_2 [0] : vector<4x256xf32> to vector<256xf32>
    %5 = vector.shape_cast %4 : vector<256xf32> to vector<1x256xf32>
    %cst_3 = arith.constant 2.500000e-01 : f32
    %6 = vector.broadcast %cst_3 : f32 to vector<1x256xf32>
    %7 = arith.mulf %5, %6 : vector<1x256xf32>
    %cst_4 = arith.constant 0.000000e+00 : f32
    %8 = vector.broadcast %cst_4 : f32 to vector<22x22xf32>
    %c0_5 = arith.constant 0 : index
    %c0_6 = arith.constant 0 : index
    %9 = vector.load %arg4[%c0_5, %c0_6] : memref<22x22xf32, #tpu.memory_space<vmem>>, vector<22x22xf32>
    tpu.vector_store %arg4[%c0_5, %c0_6], %8 {strides = array<i32>} : memref<22x22xf32, #tpu.memory_space<vmem>>, vector<22x22xf32>,
    %cst_7 = arith.constant 0.000000e+00 : f32
    %10 = vector.broadcast %cst_7 : f32 to vector<22x22xf32>
    %c0_8 = arith.constant 0 : index
    %c0_9 = arith.constant 0 : index
    %11 = vector.load %arg5[%c0_8, %c0_9] : memref<22x22xf32, #tpu.memory_space<vmem>>, vector<22x22xf32>
    tpu.vector_store %arg5[%c0_8, %c0_9], %10 {strides = array<i32>} : memref<22x22xf32, #tpu.memory_space<vmem>>, vector<22x22xf32>,
    %12 = vector.extract_strided_slice %3 {offsets = [0, 0], sizes = [1, 16], strides = [1, 1]} : vector<1x256xf32> to vector<1x16xf32>
    %c3 = arith.constant 3 : index
    %c3_10 = arith.constant 3 : index
    %13 = vector.load %arg4[%c3, %c3_10] : memref<22x22xf32, #tpu.memory_space<vmem>>, vector<1x16xf32>
    tpu.vector_store %arg4[%c3, %c3_10], %12 {strides = array<i32>} : memref<22x22xf32, #tpu.memory_space<vmem>>, vector<1x16xf32>,
    %14 = vector.extract_strided_slice %7 {offsets = [0, 0], sizes = [1, 16], strides = [1, 1]} : vector<1x256xf32> to vector<1x16xf32>
    %c3_11 = arith.constant 3 : index
    %c3_12 = arith.constant 3 : index
    %15 = vector.load %arg5[%c3_11, %c3_12] : memref<22x22xf32, #tpu.memory_space<vmem>>, vector<1x16xf32>
    tpu.vector_store %arg5[%c3_11, %c3_12], %14 {strides = array<i32>} : memref<22x22xf32, #tpu.memory_space<vmem>>, vector<1x16xf32>,
    %16 = vector.extract_strided_slice %3 {offsets = [0, 16], sizes = [1, 16], strides = [1, 1]} : vector<1x256xf32> to vector<1x16xf32>
    %c4 = arith.constant 4 : index
    %c3_13 = arith.constant 3 : index
    %17 = vector.load %arg4[%c4, %c3_13] : memref<22x22xf32, #tpu.memory_space<vmem>>, vector<1x16xf32>
    tpu.vector_store %arg4[%c4, %c3_13], %16 {strides = array<i32>} : memref<22x22xf32, #tpu.memory_space<vmem>>, vector<1x16xf32>,
    %18 = vector.extract_strided_slice %7 {offsets = [0, 16], sizes = [1, 16], strides = [1, 1]} : vector<1x256xf32> to vector<1x16xf32>
    %c4_14 = arith.constant 4 : index
    %c3_15 = arith.constant 3 : index
    %19 = vector.load %arg5[%c4_14, %c3_15] : memref<22x22xf32, #tpu.memory_space<vmem>>, vector<1x16xf32>
    tpu.vector_store %arg5[%c4_14, %c3_15], %18 {strides = array<i32>} : memref<22x22xf32, #tpu.memory_space<vmem>>, vector<1x16xf32>,
    %20 = vector.extract_strided_slice %3 {offsets = [0, 32], sizes = [1, 16], strides = [1, 1]} : vector<1x256xf32> to vector<1x16xf32>
    %c5 = arith.constant 5 : index
    %c3_16 = arith.constant 3 : index
    %21 = vector.load %arg4[%c5, %c3_16] : memref<22x22xf32, #tpu.memory_space<vmem>>, vector<1x16xf32>
    tpu.vector_store %arg4[%c5, %c3_16], %20 {strides = array<i32>} : memref<22x22xf32, #tpu.memory_space<vmem>>, vector<1x16xf32>,
    %22 = vector.extract_strided_slice %7 {offsets = [0, 32], sizes = [1, 16], strides = [1, 1]} : vector<1x256xf32> to vector<1x16xf32>
    %c5_17 = arith.constant 5 : index
    %c3_18 = arith.constant 3 : index
    %23 = vector.load %arg5[%c5_17, %c3_18] : memref<22x22xf32, #tpu.memory_space<vmem>>, vector<1x16xf32>
    tpu.vector_store %arg5[%c5_17, %c3_18], %22 {strides = array<i32>} : memref<22x22xf32, #tpu.memory_space<vmem>>, vector<1x16xf32>,
    %24 = vector.extract_strided_slice %3 {offsets = [0, 48], sizes = [1, 16], strides = [1, 1]} : vector<1x256xf32> to vector<1x16xf32>
    %c6 = arith.constant 6 : index
    %c3_19 = arith.constant 3 : index
    %25 = vector.load %arg4[%c6, %c3_19] : memref<22x22xf32, #tpu.memory_space<vmem>>, vector<1x16xf32>
    tpu.vector_store %arg4[%c6, %c3_19], %24 {strides = array<i32>} : memref<22x22xf32, #tpu.memory_space<vmem>>, vector<1x16xf32>,
    %26 = vector.extract_strided_slice %7 {offsets = [0, 48], sizes = [1, 16], strides = [1, 1]} : vector<1x256xf32> to vector<1x16xf32>
    %c6_20 = arith.constant 6 : index
    %c3_21 = arith.constant 3 : index
    %27 = vector.load %arg5[%c6_20, %c3_21] : memref<22x22xf32, #tpu.memory_space<vmem>>, vector<1x16xf32>
    tpu.vector_store %arg5[%c6_20, %c3_21], %26 {strides = array<i32>} : memref<22x22xf32, #tpu.memory_space<vmem>>, vector<1x16xf32>,
    %28 = vector.extract_strided_slice %3 {offsets = [0, 64], sizes = [1, 16], strides = [1, 1]} : vector<1x256xf32> to vector<1x16xf32>
    %c7 = arith.constant 7 : index
    %c3_22 = arith.constant 3 : index
    %29 = vector.load %arg4[%c7, %c3_22] : memref<22x22xf32, #tpu.memory_space<vmem>>, vector<1x16xf32>
    tpu.vector_store %arg4[%c7, %c3_22], %28 {strides = array<i32>} : memref<22x22xf32, #tpu.memory_space<vmem>>, vector<1x16xf32>,
    %30 = vector.extract_strided_slice %7 {offsets = [0, 64], sizes = [1, 16], strides = [1, 1]} : vector<1x256xf32> to vector<1x16xf32>
    %c7_23 = arith.constant 7 : index
    %c3_24 = arith.constant 3 : index
    %31 = vector.load %arg5[%c7_23, %c3_24] : memref<22x22xf32, #tpu.memory_space<vmem>>, vector<1x16xf32>
    tpu.vector_store %arg5[%c7_23, %c3_24], %30 {strides = array<i32>} : memref<22x22xf32, #tpu.memory_space<vmem>>, vector<1x16xf32>,
    %32 = vector.extract_strided_slice %3 {offsets = [0, 80], sizes = [1, 16], strides = [1, 1]} : vector<1x256xf32> to vector<1x16xf32>
    %c8 = arith.constant 8 : index
    %c3_25 = arith.constant 3 : index
    %33 = vector.load %arg4[%c8, %c3_25] : memref<22x22xf32, #tpu.memory_space<vmem>>, vector<1x16xf32>
    tpu.vector_store %arg4[%c8, %c3_25], %32 {strides = array<i32>} : memref<22x22xf32, #tpu.memory_space<vmem>>, vector<1x16xf32>,
    %34 = vector.extract_strided_slice %7 {offsets = [0, 80], sizes = [1, 16], strides = [1, 1]} : vector<1x256xf32> to vector<1x16xf32>
    %c8_26 = arith.constant 8 : index
    %c3_27 = arith.constant 3 : index
    %35 = vector.load %arg5[%c8_26, %c3_27] : memref<22x22xf32, #tpu.memory_space<vmem>>, vector<1x16xf32>
    tpu.vector_store %arg5[%c8_26, %c3_27], %34 {strides = array<i32>} : memref<22x22xf32, #tpu.memory_space<vmem>>, vector<1x16xf32>,
    %36 = vector.extract_strided_slice %3 {offsets = [0, 96], sizes = [1, 16], strides = [1, 1]} : vector<1x256xf32> to vector<1x16xf32>
    %c9 = arith.constant 9 : index
    %c3_28 = arith.constant 3 : index
    %37 = vector.load %arg4[%c9, %c3_28] : memref<22x22xf32, #tpu.memory_space<vmem>>, vector<1x16xf32>
    tpu.vector_store %arg4[%c9, %c3_28], %36 {strides = array<i32>} : memref<22x22xf32, #tpu.memory_space<vmem>>, vector<1x16xf32>,
    %38 = vector.extract_strided_slice %7 {offsets = [0, 96], sizes = [1, 16], strides = [1, 1]} : vector<1x256xf32> to vector<1x16xf32>
    %c9_29 = arith.constant 9 : index
    %c3_30 = arith.constant 3 : index
    %39 = vector.load %arg5[%c9_29, %c3_30] : memref<22x22xf32, #tpu.memory_space<vmem>>, vector<1x16xf32>
    tpu.vector_store %arg5[%c9_29, %c3_30], %38 {strides = array<i32>} : memref<22x22xf32, #tpu.memory_space<vmem>>, vector<1x16xf32>,
    %40 = vector.extract_strided_slice %3 {offsets = [0, 112], sizes = [1, 16], strides = [1, 1]} : vector<1x256xf32> to vector<1x16xf32>
    %c10 = arith.constant 10 : index
    %c3_31 = arith.constant 3 : index
    %41 = vector.load %arg4[%c10, %c3_31] : memref<22x22xf32, #tpu.memory_space<vmem>>, vector<1x16xf32>
    tpu.vector_store %arg4[%c10, %c3_31], %40 {strides = array<i32>} : memref<22x22xf32, #tpu.memory_space<vmem>>, vector<1x16xf32>,
    %42 = vector.extract_strided_slice %7 {offsets = [0, 112], sizes = [1, 16], strides = [1, 1]} : vector<1x256xf32> to vector<1x16xf32>
    %c10_32 = arith.constant 10 : index
    %c3_33 = arith.constant 3 : index
    %43 = vector.load %arg5[%c10_32, %c3_33] : memref<22x22xf32, #tpu.memory_space<vmem>>, vector<1x16xf32>
    tpu.vector_store %arg5[%c10_32, %c3_33], %42 {strides = array<i32>} : memref<22x22xf32, #tpu.memory_space<vmem>>, vector<1x16xf32>,
    %44 = vector.extract_strided_slice %3 {offsets = [0, 128], sizes = [1, 16], strides = [1, 1]} : vector<1x256xf32> to vector<1x16xf32>
    %c11 = arith.constant 11 : index
    %c3_34 = arith.constant 3 : index
    %45 = vector.load %arg4[%c11, %c3_34] : memref<22x22xf32, #tpu.memory_space<vmem>>, vector<1x16xf32>
    tpu.vector_store %arg4[%c11, %c3_34], %44 {strides = array<i32>} : memref<22x22xf32, #tpu.memory_space<vmem>>, vector<1x16xf32>,
    %46 = vector.extract_strided_slice %7 {offsets = [0, 128], sizes = [1, 16], strides = [1, 1]} : vector<1x256xf32> to vector<1x16xf32>
    %c11_35 = arith.constant 11 : index
    %c3_36 = arith.constant 3 : index
    %47 = vector.load %arg5[%c11_35, %c3_36] : memref<22x22xf32, #tpu.memory_space<vmem>>, vector<1x16xf32>
    tpu.vector_store %arg5[%c11_35, %c3_36], %46 {strides = array<i32>} : memref<22x22xf32, #tpu.memory_space<vmem>>, vector<1x16xf32>,
    %48 = vector.extract_strided_slice %3 {offsets = [0, 144], sizes = [1, 16], strides = [1, 1]} : vector<1x256xf32> to vector<1x16xf32>
    %c12 = arith.constant 12 : index
    %c3_37 = arith.constant 3 : index
    %49 = vector.load %arg4[%c12, %c3_37] : memref<22x22xf32, #tpu.memory_space<vmem>>, vector<1x16xf32>
    tpu.vector_store %arg4[%c12, %c3_37], %48 {strides = array<i32>} : memref<22x22xf32, #tpu.memory_space<vmem>>, vector<1x16xf32>,
    %50 = vector.extract_strided_slice %7 {offsets = [0, 144], sizes = [1, 16], strides = [1, 1]} : vector<1x256xf32> to vector<1x16xf32>
    %c12_38 = arith.constant 12 : index
    %c3_39 = arith.constant 3 : index
    %51 = vector.load %arg5[%c12_38, %c3_39] : memref<22x22xf32, #tpu.memory_space<vmem>>, vector<1x16xf32>
    tpu.vector_store %arg5[%c12_38, %c3_39], %50 {strides = array<i32>} : memref<22x22xf32, #tpu.memory_space<vmem>>, vector<1x16xf32>,
    %52 = vector.extract_strided_slice %3 {offsets = [0, 160], sizes = [1, 16], strides = [1, 1]} : vector<1x256xf32> to vector<1x16xf32>
    %c13 = arith.constant 13 : index
    %c3_40 = arith.constant 3 : index
    %53 = vector.load %arg4[%c13, %c3_40] : memref<22x22xf32, #tpu.memory_space<vmem>>, vector<1x16xf32>
    tpu.vector_store %arg4[%c13, %c3_40], %52 {strides = array<i32>} : memref<22x22xf32, #tpu.memory_space<vmem>>, vector<1x16xf32>,
    %54 = vector.extract_strided_slice %7 {offsets = [0, 160], sizes = [1, 16], strides = [1, 1]} : vector<1x256xf32> to vector<1x16xf32>
    %c13_41 = arith.constant 13 : index
    %c3_42 = arith.constant 3 : index
    %55 = vector.load %arg5[%c13_41, %c3_42] : memref<22x22xf32, #tpu.memory_space<vmem>>, vector<1x16xf32>
    tpu.vector_store %arg5[%c13_41, %c3_42], %54 {strides = array<i32>} : memref<22x22xf32, #tpu.memory_space<vmem>>, vector<1x16xf32>,
    %56 = vector.extract_strided_slice %3 {offsets = [0, 176], sizes = [1, 16], strides = [1, 1]} : vector<1x256xf32> to vector<1x16xf32>
    %c14 = arith.constant 14 : index
    %c3_43 = arith.constant 3 : index
    %57 = vector.load %arg4[%c14, %c3_43] : memref<22x22xf32, #tpu.memory_space<vmem>>, vector<1x16xf32>
    tpu.vector_store %arg4[%c14, %c3_43], %56 {strides = array<i32>} : memref<22x22xf32, #tpu.memory_space<vmem>>, vector<1x16xf32>,
    %58 = vector.extract_strided_slice %7 {offsets = [0, 176], sizes = [1, 16], strides = [1, 1]} : vector<1x256xf32> to vector<1x16xf32>
    %c14_44 = arith.constant 14 : index
    %c3_45 = arith.constant 3 : index
    %59 = vector.load %arg5[%c14_44, %c3_45] : memref<22x22xf32, #tpu.memory_space<vmem>>, vector<1x16xf32>
    tpu.vector_store %arg5[%c14_44, %c3_45], %58 {strides = array<i32>} : memref<22x22xf32, #tpu.memory_space<vmem>>, vector<1x16xf32>,
    %60 = vector.extract_strided_slice %3 {offsets = [0, 192], sizes = [1, 16], strides = [1, 1]} : vector<1x256xf32> to vector<1x16xf32>
    %c15 = arith.constant 15 : index
    %c3_46 = arith.constant 3 : index
    %61 = vector.load %arg4[%c15, %c3_46] : memref<22x22xf32, #tpu.memory_space<vmem>>, vector<1x16xf32>
    tpu.vector_store %arg4[%c15, %c3_46], %60 {strides = array<i32>} : memref<22x22xf32, #tpu.memory_space<vmem>>, vector<1x16xf32>,
    %62 = vector.extract_strided_slice %7 {offsets = [0, 192], sizes = [1, 16], strides = [1, 1]} : vector<1x256xf32> to vector<1x16xf32>
    %c15_47 = arith.constant 15 : index
    %c3_48 = arith.constant 3 : index
    %63 = vector.load %arg5[%c15_47, %c3_48] : memref<22x22xf32, #tpu.memory_space<vmem>>, vector<1x16xf32>
    tpu.vector_store %arg5[%c15_47, %c3_48], %62 {strides = array<i32>} : memref<22x22xf32, #tpu.memory_space<vmem>>, vector<1x16xf32>,
    %64 = vector.extract_strided_slice %3 {offsets = [0, 208], sizes = [1, 16], strides = [1, 1]} : vector<1x256xf32> to vector<1x16xf32>
    %c16 = arith.constant 16 : index
    %c3_49 = arith.constant 3 : index
    %65 = vector.load %arg4[%c16, %c3_49] : memref<22x22xf32, #tpu.memory_space<vmem>>, vector<1x16xf32>
    tpu.vector_store %arg4[%c16, %c3_49], %64 {strides = array<i32>} : memref<22x22xf32, #tpu.memory_space<vmem>>, vector<1x16xf32>,
    %66 = vector.extract_strided_slice %7 {offsets = [0, 208], sizes = [1, 16], strides = [1, 1]} : vector<1x256xf32> to vector<1x16xf32>
    %c16_50 = arith.constant 16 : index
    %c3_51 = arith.constant 3 : index
    %67 = vector.load %arg5[%c16_50, %c3_51] : memref<22x22xf32, #tpu.memory_space<vmem>>, vector<1x16xf32>
    tpu.vector_store %arg5[%c16_50, %c3_51], %66 {strides = array<i32>} : memref<22x22xf32, #tpu.memory_space<vmem>>, vector<1x16xf32>,
    %68 = vector.extract_strided_slice %3 {offsets = [0, 224], sizes = [1, 16], strides = [1, 1]} : vector<1x256xf32> to vector<1x16xf32>
    %c17 = arith.constant 17 : index
    %c3_52 = arith.constant 3 : index
    %69 = vector.load %arg4[%c17, %c3_52] : memref<22x22xf32, #tpu.memory_space<vmem>>, vector<1x16xf32>
    tpu.vector_store %arg4[%c17, %c3_52], %68 {strides = array<i32>} : memref<22x22xf32, #tpu.memory_space<vmem>>, vector<1x16xf32>,
    %70 = vector.extract_strided_slice %7 {offsets = [0, 224], sizes = [1, 16], strides = [1, 1]} : vector<1x256xf32> to vector<1x16xf32>
    %c17_53 = arith.constant 17 : index
    %c3_54 = arith.constant 3 : index
    %71 = vector.load %arg5[%c17_53, %c3_54] : memref<22x22xf32, #tpu.memory_space<vmem>>, vector<1x16xf32>
    tpu.vector_store %arg5[%c17_53, %c3_54], %70 {strides = array<i32>} : memref<22x22xf32, #tpu.memory_space<vmem>>, vector<1x16xf32>,
    %72 = vector.extract_strided_slice %3 {offsets = [0, 240], sizes = [1, 16], strides = [1, 1]} : vector<1x256xf32> to vector<1x16xf32>
    %c18 = arith.constant 18 : index
    %c3_55 = arith.constant 3 : index
    %73 = vector.load %arg4[%c18, %c3_55] : memref<22x22xf32, #tpu.memory_space<vmem>>, vector<1x16xf32>
    tpu.vector_store %arg4[%c18, %c3_55], %72 {strides = array<i32>} : memref<22x22xf32, #tpu.memory_space<vmem>>, vector<1x16xf32>,
    %74 = vector.extract_strided_slice %7 {offsets = [0, 240], sizes = [1, 16], strides = [1, 1]} : vector<1x256xf32> to vector<1x16xf32>
    %c18_56 = arith.constant 18 : index
    %c3_57 = arith.constant 3 : index
    %75 = vector.load %arg5[%c18_56, %c3_57] : memref<22x22xf32, #tpu.memory_space<vmem>>, vector<1x16xf32>
    tpu.vector_store %arg5[%c18_56, %c3_57], %74 {strides = array<i32>} : memref<22x22xf32, #tpu.memory_space<vmem>>, vector<1x16xf32>,
    %c0_58 = arith.constant 0 : index
    %c0_59 = arith.constant 0 : index
    %76 = vector.load %arg4[%c0_58, %c0_59] : memref<22x22xf32, #tpu.memory_space<vmem>>, vector<22x22xf32>
    %c0_60 = arith.constant 0 : index
    %c0_61 = arith.constant 0 : index
    %77 = vector.load %arg5[%c0_60, %c0_61] : memref<22x22xf32, #tpu.memory_space<vmem>>, vector<22x22xf32>
    %c0_62 = arith.constant 0 : index
    %78 = memref.load %arg1[%c0_62] : memref<98xf32, #tpu.memory_space<smem>>
    %c1 = arith.constant 1 : index
    %79 = memref.load %arg1[%c1] : memref<98xf32, #tpu.memory_space<smem>>
    %c2 = arith.constant 2 : index
    %80 = memref.load %arg1[%c2] : memref<98xf32, #tpu.memory_space<smem>>
    %c3_63 = arith.constant 3 : index
    %81 = memref.load %arg1[%c3_63] : memref<98xf32, #tpu.memory_space<smem>>
    %c4_64 = arith.constant 4 : index
    %82 = memref.load %arg1[%c4_64] : memref<98xf32, #tpu.memory_space<smem>>
    %c5_65 = arith.constant 5 : index
    %83 = memref.load %arg1[%c5_65] : memref<98xf32, #tpu.memory_space<smem>>
    %c6_66 = arith.constant 6 : index
    %84 = memref.load %arg1[%c6_66] : memref<98xf32, #tpu.memory_space<smem>>
    %c7_67 = arith.constant 7 : index
    %85 = memref.load %arg1[%c7_67] : memref<98xf32, #tpu.memory_space<smem>>
    %c8_68 = arith.constant 8 : index
    %86 = memref.load %arg1[%c8_68] : memref<98xf32, #tpu.memory_space<smem>>
    %c9_69 = arith.constant 9 : index
    %87 = memref.load %arg1[%c9_69] : memref<98xf32, #tpu.memory_space<smem>>
    %c10_70 = arith.constant 10 : index
    %88 = memref.load %arg1[%c10_70] : memref<98xf32, #tpu.memory_space<smem>>
    %c11_71 = arith.constant 11 : index
    %89 = memref.load %arg1[%c11_71] : memref<98xf32, #tpu.memory_space<smem>>
    %c12_72 = arith.constant 12 : index
    %90 = memref.load %arg1[%c12_72] : memref<98xf32, #tpu.memory_space<smem>>
    %c13_73 = arith.constant 13 : index
    %91 = memref.load %arg1[%c13_73] : memref<98xf32, #tpu.memory_space<smem>>
    %c14_74 = arith.constant 14 : index
    %92 = memref.load %arg1[%c14_74] : memref<98xf32, #tpu.memory_space<smem>>
    %c15_75 = arith.constant 15 : index
    %93 = memref.load %arg1[%c15_75] : memref<98xf32, #tpu.memory_space<smem>>
    %c16_76 = arith.constant 16 : index
    %94 = memref.load %arg1[%c16_76] : memref<98xf32, #tpu.memory_space<smem>>
    %c17_77 = arith.constant 17 : index
    %95 = memref.load %arg1[%c17_77] : memref<98xf32, #tpu.memory_space<smem>>
    %c18_78 = arith.constant 18 : index
    %96 = memref.load %arg1[%c18_78] : memref<98xf32, #tpu.memory_space<smem>>
    %c19 = arith.constant 19 : index
    %97 = memref.load %arg1[%c19] : memref<98xf32, #tpu.memory_space<smem>>
    %c20 = arith.constant 20 : index
    %98 = memref.load %arg1[%c20] : memref<98xf32, #tpu.memory_space<smem>>
    %c21 = arith.constant 21 : index
    %99 = memref.load %arg1[%c21] : memref<98xf32, #tpu.memory_space<smem>>
    %c22 = arith.constant 22 : index
    %100 = memref.load %arg1[%c22] : memref<98xf32, #tpu.memory_space<smem>>
    %c23 = arith.constant 23 : index
    %101 = memref.load %arg1[%c23] : memref<98xf32, #tpu.memory_space<smem>>
    %c24 = arith.constant 24 : index
    %102 = memref.load %arg1[%c24] : memref<98xf32, #tpu.memory_space<smem>>
    %c25 = arith.constant 25 : index
    %103 = memref.load %arg1[%c25] : memref<98xf32, #tpu.memory_space<smem>>
    %c26 = arith.constant 26 : index
    %104 = memref.load %arg1[%c26] : memref<98xf32, #tpu.memory_space<smem>>
    %c27 = arith.constant 27 : index
    %105 = memref.load %arg1[%c27] : memref<98xf32, #tpu.memory_space<smem>>
    %c28 = arith.constant 28 : index
    %106 = memref.load %arg1[%c28] : memref<98xf32, #tpu.memory_space<smem>>
    %c29 = arith.constant 29 : index
    %107 = memref.load %arg1[%c29] : memref<98xf32, #tpu.memory_space<smem>>
    %c30 = arith.constant 30 : index
    %108 = memref.load %arg1[%c30] : memref<98xf32, #tpu.memory_space<smem>>
    %c31 = arith.constant 31 : index
    %109 = memref.load %arg1[%c31] : memref<98xf32, #tpu.memory_space<smem>>
    %c32 = arith.constant 32 : index
    %110 = memref.load %arg1[%c32] : memref<98xf32, #tpu.memory_space<smem>>
    %c33 = arith.constant 33 : index
    %111 = memref.load %arg1[%c33] : memref<98xf32, #tpu.memory_space<smem>>
    %c34 = arith.constant 34 : index
    %112 = memref.load %arg1[%c34] : memref<98xf32, #tpu.memory_space<smem>>
    %c35 = arith.constant 35 : index
    %113 = memref.load %arg1[%c35] : memref<98xf32, #tpu.memory_space<smem>>
    %c36 = arith.constant 36 : index
    %114 = memref.load %arg1[%c36] : memref<98xf32, #tpu.memory_space<smem>>
    %c37 = arith.constant 37 : index
    %115 = memref.load %arg1[%c37] : memref<98xf32, #tpu.memory_space<smem>>
    %c38 = arith.constant 38 : index
    %116 = memref.load %arg1[%c38] : memref<98xf32, #tpu.memory_space<smem>>
    %c39 = arith.constant 39 : index
    %117 = memref.load %arg1[%c39] : memref<98xf32, #tpu.memory_space<smem>>
    %c40 = arith.constant 40 : index
    %118 = memref.load %arg1[%c40] : memref<98xf32, #tpu.memory_space<smem>>
    %c41 = arith.constant 41 : index
    %119 = memref.load %arg1[%c41] : memref<98xf32, #tpu.memory_space<smem>>
    %c42 = arith.constant 42 : index
    %120 = memref.load %arg1[%c42] : memref<98xf32, #tpu.memory_space<smem>>
    %c43 = arith.constant 43 : index
    %121 = memref.load %arg1[%c43] : memref<98xf32, #tpu.memory_space<smem>>
    %c44 = arith.constant 44 : index
    %122 = memref.load %arg1[%c44] : memref<98xf32, #tpu.memory_space<smem>>
    %c45 = arith.constant 45 : index
    %123 = memref.load %arg1[%c45] : memref<98xf32, #tpu.memory_space<smem>>
    %c46 = arith.constant 46 : index
    %124 = memref.load %arg1[%c46] : memref<98xf32, #tpu.memory_space<smem>>
    %c47 = arith.constant 47 : index
    %125 = memref.load %arg1[%c47] : memref<98xf32, #tpu.memory_space<smem>>
    %c48 = arith.constant 48 : index
    %126 = memref.load %arg1[%c48] : memref<98xf32, #tpu.memory_space<smem>>
    %c49 = arith.constant 49 : index
    %127 = memref.load %arg1[%c49] : memref<98xf32, #tpu.memory_space<smem>>
    %c50 = arith.constant 50 : index
    %128 = memref.load %arg1[%c50] : memref<98xf32, #tpu.memory_space<smem>>
    %c51 = arith.constant 51 : index
    %129 = memref.load %arg1[%c51] : memref<98xf32, #tpu.memory_space<smem>>
    %c52 = arith.constant 52 : index
    %130 = memref.load %arg1[%c52] : memref<98xf32, #tpu.memory_space<smem>>
    %c53 = arith.constant 53 : index
    %131 = memref.load %arg1[%c53] : memref<98xf32, #tpu.memory_space<smem>>
    %c54 = arith.constant 54 : index
    %132 = memref.load %arg1[%c54] : memref<98xf32, #tpu.memory_space<smem>>
    %c55 = arith.constant 55 : index
    %133 = memref.load %arg1[%c55] : memref<98xf32, #tpu.memory_space<smem>>
    %c56 = arith.constant 56 : index
    %134 = memref.load %arg1[%c56] : memref<98xf32, #tpu.memory_space<smem>>
    %c57 = arith.constant 57 : index
    %135 = memref.load %arg1[%c57] : memref<98xf32, #tpu.memory_space<smem>>
    %c58 = arith.constant 58 : index
    %136 = memref.load %arg1[%c58] : memref<98xf32, #tpu.memory_space<smem>>
    %c59 = arith.constant 59 : index
    %137 = memref.load %arg1[%c59] : memref<98xf32, #tpu.memory_space<smem>>
    %c60 = arith.constant 60 : index
    %138 = memref.load %arg1[%c60] : memref<98xf32, #tpu.memory_space<smem>>
    %c61 = arith.constant 61 : index
    %139 = memref.load %arg1[%c61] : memref<98xf32, #tpu.memory_space<smem>>
    %c62 = arith.constant 62 : index
    %140 = memref.load %arg1[%c62] : memref<98xf32, #tpu.memory_space<smem>>
    %c63 = arith.constant 63 : index
    %141 = memref.load %arg1[%c63] : memref<98xf32, #tpu.memory_space<smem>>
    %c64 = arith.constant 64 : index
    %142 = memref.load %arg1[%c64] : memref<98xf32, #tpu.memory_space<smem>>
    %c65 = arith.constant 65 : index
    %143 = memref.load %arg1[%c65] : memref<98xf32, #tpu.memory_space<smem>>
    %c66 = arith.constant 66 : index
    %144 = memref.load %arg1[%c66] : memref<98xf32, #tpu.memory_space<smem>>
    %c67 = arith.constant 67 : index
    %145 = memref.load %arg1[%c67] : memref<98xf32, #tpu.memory_space<smem>>
    %c68 = arith.constant 68 : index
    %146 = memref.load %arg1[%c68] : memref<98xf32, #tpu.memory_space<smem>>
    %c69 = arith.constant 69 : index
    %147 = memref.load %arg1[%c69] : memref<98xf32, #tpu.memory_space<smem>>
    %c70 = arith.constant 70 : index
    %148 = memref.load %arg1[%c70] : memref<98xf32, #tpu.memory_space<smem>>
    %c71 = arith.constant 71 : index
    %149 = memref.load %arg1[%c71] : memref<98xf32, #tpu.memory_space<smem>>
    %c72 = arith.constant 72 : index
    %150 = memref.load %arg1[%c72] : memref<98xf32, #tpu.memory_space<smem>>
    %c73 = arith.constant 73 : index
    %151 = memref.load %arg1[%c73] : memref<98xf32, #tpu.memory_space<smem>>
    %c74 = arith.constant 74 : index
    %152 = memref.load %arg1[%c74] : memref<98xf32, #tpu.memory_space<smem>>
    %c75 = arith.constant 75 : index
    %153 = memref.load %arg1[%c75] : memref<98xf32, #tpu.memory_space<smem>>
    %c76 = arith.constant 76 : index
    %154 = memref.load %arg1[%c76] : memref<98xf32, #tpu.memory_space<smem>>
    %c77 = arith.constant 77 : index
    %155 = memref.load %arg1[%c77] : memref<98xf32, #tpu.memory_space<smem>>
    %c78 = arith.constant 78 : index
    %156 = memref.load %arg1[%c78] : memref<98xf32, #tpu.memory_space<smem>>
    %c79 = arith.constant 79 : index
    %157 = memref.load %arg1[%c79] : memref<98xf32, #tpu.memory_space<smem>>
    %c80 = arith.constant 80 : index
    %158 = memref.load %arg1[%c80] : memref<98xf32, #tpu.memory_space<smem>>
    %c81 = arith.constant 81 : index
    %159 = memref.load %arg1[%c81] : memref<98xf32, #tpu.memory_space<smem>>
    %c82 = arith.constant 82 : index
    %160 = memref.load %arg1[%c82] : memref<98xf32, #tpu.memory_space<smem>>
    %c83 = arith.constant 83 : index
    %161 = memref.load %arg1[%c83] : memref<98xf32, #tpu.memory_space<smem>>
    %c84 = arith.constant 84 : index
    %162 = memref.load %arg1[%c84] : memref<98xf32, #tpu.memory_space<smem>>
    %c85 = arith.constant 85 : index
    %163 = memref.load %arg1[%c85] : memref<98xf32, #tpu.memory_space<smem>>
    %c86 = arith.constant 86 : index
    %164 = memref.load %arg1[%c86] : memref<98xf32, #tpu.memory_space<smem>>
    %c87 = arith.constant 87 : index
    %165 = memref.load %arg1[%c87] : memref<98xf32, #tpu.memory_space<smem>>
    %c88 = arith.constant 88 : index
    %166 = memref.load %arg1[%c88] : memref<98xf32, #tpu.memory_space<smem>>
    %c89 = arith.constant 89 : index
    %167 = memref.load %arg1[%c89] : memref<98xf32, #tpu.memory_space<smem>>
    %c90 = arith.constant 90 : index
    %168 = memref.load %arg1[%c90] : memref<98xf32, #tpu.memory_space<smem>>
    %c91 = arith.constant 91 : index
    %169 = memref.load %arg1[%c91] : memref<98xf32, #tpu.memory_space<smem>>
    %c92 = arith.constant 92 : index
    %170 = memref.load %arg1[%c92] : memref<98xf32, #tpu.memory_space<smem>>
    %c93 = arith.constant 93 : index
    %171 = memref.load %arg1[%c93] : memref<98xf32, #tpu.memory_space<smem>>
    %c94 = arith.constant 94 : index
    %172 = memref.load %arg1[%c94] : memref<98xf32, #tpu.memory_space<smem>>
    %c95 = arith.constant 95 : index
    %173 = memref.load %arg1[%c95] : memref<98xf32, #tpu.memory_space<smem>>
    %c96 = arith.constant 96 : index
    %174 = memref.load %arg1[%c96] : memref<98xf32, #tpu.memory_space<smem>>
    %c97 = arith.constant 97 : index
    %175 = memref.load %arg1[%c97] : memref<98xf32, #tpu.memory_space<smem>>
    %176 = vector.extract_strided_slice %76 {offsets = [0, 0], sizes = [22, 16], strides = [1, 1]} : vector<22x22xf32> to vector<22x16xf32>
    %177 = vector.extract_strided_slice %76 {offsets = [0, 1], sizes = [22, 16], strides = [1, 1]} : vector<22x22xf32> to vector<22x16xf32>
    %178 = vector.extract_strided_slice %76 {offsets = [0, 2], sizes = [22, 16], strides = [1, 1]} : vector<22x22xf32> to vector<22x16xf32>
    %179 = vector.extract_strided_slice %76 {offsets = [0, 3], sizes = [22, 16], strides = [1, 1]} : vector<22x22xf32> to vector<22x16xf32>
    %180 = vector.extract_strided_slice %76 {offsets = [0, 4], sizes = [22, 16], strides = [1, 1]} : vector<22x22xf32> to vector<22x16xf32>
    %181 = vector.extract_strided_slice %76 {offsets = [0, 5], sizes = [22, 16], strides = [1, 1]} : vector<22x22xf32> to vector<22x16xf32>
    %182 = vector.extract_strided_slice %76 {offsets = [0, 6], sizes = [22, 16], strides = [1, 1]} : vector<22x22xf32> to vector<22x16xf32>
    %183 = vector.extract_strided_slice %77 {offsets = [0, 0], sizes = [22, 16], strides = [1, 1]} : vector<22x22xf32> to vector<22x16xf32>
    %184 = vector.extract_strided_slice %77 {offsets = [0, 1], sizes = [22, 16], strides = [1, 1]} : vector<22x22xf32> to vector<22x16xf32>
    %185 = vector.extract_strided_slice %77 {offsets = [0, 2], sizes = [22, 16], strides = [1, 1]} : vector<22x22xf32> to vector<22x16xf32>
    %186 = vector.extract_strided_slice %77 {offsets = [0, 3], sizes = [22, 16], strides = [1, 1]} : vector<22x22xf32> to vector<22x16xf32>
    %187 = vector.extract_strided_slice %77 {offsets = [0, 4], sizes = [22, 16], strides = [1, 1]} : vector<22x22xf32> to vector<22x16xf32>
    %188 = vector.extract_strided_slice %77 {offsets = [0, 5], sizes = [22, 16], strides = [1, 1]} : vector<22x22xf32> to vector<22x16xf32>
    %189 = vector.extract_strided_slice %77 {offsets = [0, 6], sizes = [22, 16], strides = [1, 1]} : vector<22x22xf32> to vector<22x16xf32>
    %190 = vector.broadcast %78 : f32 to vector<22x16xf32>
    %191 = arith.mulf %176, %190 : vector<22x16xf32>
    %192 = vector.broadcast %127 : f32 to vector<22x16xf32>
    %193 = arith.mulf %183, %192 : vector<22x16xf32>
    %194 = arith.addf %191, %193 : vector<22x16xf32>
    %195 = vector.broadcast %79 : f32 to vector<22x16xf32>
    %196 = arith.mulf %177, %195 : vector<22x16xf32>
    %197 = vector.broadcast %128 : f32 to vector<22x16xf32>
    %198 = arith.mulf %184, %197 : vector<22x16xf32>
    %199 = arith.addf %196, %198 : vector<22x16xf32>
    %200 = vector.broadcast %80 : f32 to vector<22x16xf32>
    %201 = arith.mulf %178, %200 : vector<22x16xf32>
    %202 = arith.addf %194, %201 : vector<22x16xf32>
    %203 = vector.broadcast %129 : f32 to vector<22x16xf32>
    %204 = arith.mulf %185, %203 : vector<22x16xf32>
    %205 = arith.addf %202, %204 : vector<22x16xf32>
    %206 = vector.broadcast %82 : f32 to vector<22x16xf32>
    %207 = arith.mulf %180, %206 : vector<22x16xf32>
    %208 = arith.addf %205, %207 : vector<22x16xf32>
    %209 = vector.broadcast %131 : f32 to vector<22x16xf32>
    %210 = arith.mulf %187, %209 : vector<22x16xf32>
    %211 = arith.addf %208, %210 : vector<22x16xf32>
    %212 = vector.broadcast %84 : f32 to vector<22x16xf32>
    %213 = arith.mulf %182, %212 : vector<22x16xf32>
    %214 = arith.addf %211, %213 : vector<22x16xf32>
    %215 = vector.broadcast %133 : f32 to vector<22x16xf32>
    %216 = arith.mulf %189, %215 : vector<22x16xf32>
    %217 = arith.addf %214, %216 : vector<22x16xf32>
    %218 = vector.broadcast %81 : f32 to vector<22x16xf32>
    %219 = arith.mulf %179, %218 : vector<22x16xf32>
    %220 = arith.addf %199, %219 : vector<22x16xf32>
    %221 = vector.broadcast %130 : f32 to vector<22x16xf32>
    %222 = arith.mulf %186, %221 : vector<22x16xf32>
    %223 = arith.addf %220, %222 : vector<22x16xf32>
    %224 = vector.broadcast %83 : f32 to vector<22x16xf32>
    %225 = arith.mulf %181, %224 : vector<22x16xf32>
    %226 = arith.addf %223, %225 : vector<22x16xf32>
    %227 = vector.broadcast %132 : f32 to vector<22x16xf32>
    %228 = arith.mulf %188, %227 : vector<22x16xf32>
    %229 = arith.addf %226, %228 : vector<22x16xf32>
    %230 = arith.addf %217, %229 : vector<22x16xf32>
    %231 = vector.broadcast %85 : f32 to vector<22x16xf32>
    %232 = arith.mulf %176, %231 : vector<22x16xf32>
    %233 = vector.broadcast %134 : f32 to vector<22x16xf32>
    %234 = arith.mulf %183, %233 : vector<22x16xf32>
    %235 = arith.addf %232, %234 : vector<22x16xf32>
    %236 = vector.broadcast %86 : f32 to vector<22x16xf32>
    %237 = arith.mulf %177, %236 : vector<22x16xf32>
    %238 = vector.broadcast %135 : f32 to vector<22x16xf32>
    %239 = arith.mulf %184, %238 : vector<22x16xf32>
    %240 = arith.addf %237, %239 : vector<22x16xf32>
    %241 = vector.broadcast %87 : f32 to vector<22x16xf32>
    %242 = arith.mulf %178, %241 : vector<22x16xf32>
    %243 = arith.addf %235, %242 : vector<22x16xf32>
    %244 = vector.broadcast %136 : f32 to vector<22x16xf32>
    %245 = arith.mulf %185, %244 : vector<22x16xf32>
    %246 = arith.addf %243, %245 : vector<22x16xf32>
    %247 = vector.broadcast %89 : f32 to vector<22x16xf32>
    %248 = arith.mulf %180, %247 : vector<22x16xf32>
    %249 = arith.addf %246, %248 : vector<22x16xf32>
    %250 = vector.broadcast %138 : f32 to vector<22x16xf32>
    %251 = arith.mulf %187, %250 : vector<22x16xf32>
    %252 = arith.addf %249, %251 : vector<22x16xf32>
    %253 = vector.broadcast %91 : f32 to vector<22x16xf32>
    %254 = arith.mulf %182, %253 : vector<22x16xf32>
    %255 = arith.addf %252, %254 : vector<22x16xf32>
    %256 = vector.broadcast %140 : f32 to vector<22x16xf32>
    %257 = arith.mulf %189, %256 : vector<22x16xf32>
    %258 = arith.addf %255, %257 : vector<22x16xf32>
    %259 = vector.broadcast %88 : f32 to vector<22x16xf32>
    %260 = arith.mulf %179, %259 : vector<22x16xf32>
    %261 = arith.addf %240, %260 : vector<22x16xf32>
    %262 = vector.broadcast %137 : f32 to vector<22x16xf32>
    %263 = arith.mulf %186, %262 : vector<22x16xf32>
    %264 = arith.addf %261, %263 : vector<22x16xf32>
    %265 = vector.broadcast %90 : f32 to vector<22x16xf32>
    %266 = arith.mulf %181, %265 : vector<22x16xf32>
    %267 = arith.addf %264, %266 : vector<22x16xf32>
    %268 = vector.broadcast %139 : f32 to vector<22x16xf32>
    %269 = arith.mulf %188, %268 : vector<22x16xf32>
    %270 = arith.addf %267, %269 : vector<22x16xf32>
    %271 = arith.addf %258, %270 : vector<22x16xf32>
    %272 = vector.broadcast %92 : f32 to vector<22x16xf32>
    %273 = arith.mulf %176, %272 : vector<22x16xf32>
    %274 = vector.broadcast %141 : f32 to vector<22x16xf32>
    %275 = arith.mulf %183, %274 : vector<22x16xf32>
    %276 = arith.addf %273, %275 : vector<22x16xf32>
    %277 = vector.broadcast %93 : f32 to vector<22x16xf32>
    %278 = arith.mulf %177, %277 : vector<22x16xf32>
    %279 = vector.broadcast %142 : f32 to vector<22x16xf32>
    %280 = arith.mulf %184, %279 : vector<22x16xf32>
    %281 = arith.addf %278, %280 : vector<22x16xf32>
    %282 = vector.broadcast %94 : f32 to vector<22x16xf32>
    %283 = arith.mulf %178, %282 : vector<22x16xf32>
    %284 = arith.addf %276, %283 : vector<22x16xf32>
    %285 = vector.broadcast %143 : f32 to vector<22x16xf32>
    %286 = arith.mulf %185, %285 : vector<22x16xf32>
    %287 = arith.addf %284, %286 : vector<22x16xf32>
    %288 = vector.broadcast %96 : f32 to vector<22x16xf32>
    %289 = arith.mulf %180, %288 : vector<22x16xf32>
    %290 = arith.addf %287, %289 : vector<22x16xf32>
    %291 = vector.broadcast %145 : f32 to vector<22x16xf32>
    %292 = arith.mulf %187, %291 : vector<22x16xf32>
    %293 = arith.addf %290, %292 : vector<22x16xf32>
    %294 = vector.broadcast %98 : f32 to vector<22x16xf32>
    %295 = arith.mulf %182, %294 : vector<22x16xf32>
    %296 = arith.addf %293, %295 : vector<22x16xf32>
    %297 = vector.broadcast %147 : f32 to vector<22x16xf32>
    %298 = arith.mulf %189, %297 : vector<22x16xf32>
    %299 = arith.addf %296, %298 : vector<22x16xf32>
    %300 = vector.broadcast %95 : f32 to vector<22x16xf32>
    %301 = arith.mulf %179, %300 : vector<22x16xf32>
    %302 = arith.addf %281, %301 : vector<22x16xf32>
    %303 = vector.broadcast %144 : f32 to vector<22x16xf32>
    %304 = arith.mulf %186, %303 : vector<22x16xf32>
    %305 = arith.addf %302, %304 : vector<22x16xf32>
    %306 = vector.broadcast %97 : f32 to vector<22x16xf32>
    %307 = arith.mulf %181, %306 : vector<22x16xf32>
    %308 = arith.addf %305, %307 : vector<22x16xf32>
    %309 = vector.broadcast %146 : f32 to vector<22x16xf32>
    %310 = arith.mulf %188, %309 : vector<22x16xf32>
    %311 = arith.addf %308, %310 : vector<22x16xf32>
    %312 = arith.addf %299, %311 : vector<22x16xf32>
    %313 = vector.broadcast %99 : f32 to vector<22x16xf32>
    %314 = arith.mulf %176, %313 : vector<22x16xf32>
    %315 = vector.broadcast %148 : f32 to vector<22x16xf32>
    %316 = arith.mulf %183, %315 : vector<22x16xf32>
    %317 = arith.addf %314, %316 : vector<22x16xf32>
    %318 = vector.broadcast %100 : f32 to vector<22x16xf32>
    %319 = arith.mulf %177, %318 : vector<22x16xf32>
    %320 = vector.broadcast %149 : f32 to vector<22x16xf32>
    %321 = arith.mulf %184, %320 : vector<22x16xf32>
    %322 = arith.addf %319, %321 : vector<22x16xf32>
    %323 = vector.broadcast %101 : f32 to vector<22x16xf32>
    %324 = arith.mulf %178, %323 : vector<22x16xf32>
    %325 = arith.addf %317, %324 : vector<22x16xf32>
    %326 = vector.broadcast %150 : f32 to vector<22x16xf32>
    %327 = arith.mulf %185, %326 : vector<22x16xf32>
    %328 = arith.addf %325, %327 : vector<22x16xf32>
    %329 = vector.broadcast %103 : f32 to vector<22x16xf32>
    %330 = arith.mulf %180, %329 : vector<22x16xf32>
    %331 = arith.addf %328, %330 : vector<22x16xf32>
    %332 = vector.broadcast %152 : f32 to vector<22x16xf32>
    %333 = arith.mulf %187, %332 : vector<22x16xf32>
    %334 = arith.addf %331, %333 : vector<22x16xf32>
    %335 = vector.broadcast %105 : f32 to vector<22x16xf32>
    %336 = arith.mulf %182, %335 : vector<22x16xf32>
    %337 = arith.addf %334, %336 : vector<22x16xf32>
    %338 = vector.broadcast %154 : f32 to vector<22x16xf32>
    %339 = arith.mulf %189, %338 : vector<22x16xf32>
    %340 = arith.addf %337, %339 : vector<22x16xf32>
    %341 = vector.broadcast %102 : f32 to vector<22x16xf32>
    %342 = arith.mulf %179, %341 : vector<22x16xf32>
    %343 = arith.addf %322, %342 : vector<22x16xf32>
    %344 = vector.broadcast %151 : f32 to vector<22x16xf32>
    %345 = arith.mulf %186, %344 : vector<22x16xf32>
    %346 = arith.addf %343, %345 : vector<22x16xf32>
    %347 = vector.broadcast %104 : f32 to vector<22x16xf32>
    %348 = arith.mulf %181, %347 : vector<22x16xf32>
    %349 = arith.addf %346, %348 : vector<22x16xf32>
    %350 = vector.broadcast %153 : f32 to vector<22x16xf32>
    %351 = arith.mulf %188, %350 : vector<22x16xf32>
    %352 = arith.addf %349, %351 : vector<22x16xf32>
    %353 = arith.addf %340, %352 : vector<22x16xf32>
    %354 = vector.broadcast %106 : f32 to vector<22x16xf32>
    %355 = arith.mulf %176, %354 : vector<22x16xf32>
    %356 = vector.broadcast %155 : f32 to vector<22x16xf32>
    %357 = arith.mulf %183, %356 : vector<22x16xf32>
    %358 = arith.addf %355, %357 : vector<22x16xf32>
    %359 = vector.broadcast %107 : f32 to vector<22x16xf32>
    %360 = arith.mulf %177, %359 : vector<22x16xf32>
    %361 = vector.broadcast %156 : f32 to vector<22x16xf32>
    %362 = arith.mulf %184, %361 : vector<22x16xf32>
    %363 = arith.addf %360, %362 : vector<22x16xf32>
    %364 = vector.broadcast %108 : f32 to vector<22x16xf32>
    %365 = arith.mulf %178, %364 : vector<22x16xf32>
    %366 = arith.addf %358, %365 : vector<22x16xf32>
    %367 = vector.broadcast %157 : f32 to vector<22x16xf32>
    %368 = arith.mulf %185, %367 : vector<22x16xf32>
    %369 = arith.addf %366, %368 : vector<22x16xf32>
    %370 = vector.broadcast %110 : f32 to vector<22x16xf32>
    %371 = arith.mulf %180, %370 : vector<22x16xf32>
    %372 = arith.addf %369, %371 : vector<22x16xf32>
    %373 = vector.broadcast %159 : f32 to vector<22x16xf32>
    %374 = arith.mulf %187, %373 : vector<22x16xf32>
    %375 = arith.addf %372, %374 : vector<22x16xf32>
    %376 = vector.broadcast %112 : f32 to vector<22x16xf32>
    %377 = arith.mulf %182, %376 : vector<22x16xf32>
    %378 = arith.addf %375, %377 : vector<22x16xf32>
    %379 = vector.broadcast %161 : f32 to vector<22x16xf32>
    %380 = arith.mulf %189, %379 : vector<22x16xf32>
    %381 = arith.addf %378, %380 : vector<22x16xf32>
    %382 = vector.broadcast %109 : f32 to vector<22x16xf32>
    %383 = arith.mulf %179, %382 : vector<22x16xf32>
    %384 = arith.addf %363, %383 : vector<22x16xf32>
    %385 = vector.broadcast %158 : f32 to vector<22x16xf32>
    %386 = arith.mulf %186, %385 : vector<22x16xf32>
    %387 = arith.addf %384, %386 : vector<22x16xf32>
    %388 = vector.broadcast %111 : f32 to vector<22x16xf32>
    %389 = arith.mulf %181, %388 : vector<22x16xf32>
    %390 = arith.addf %387, %389 : vector<22x16xf32>
    %391 = vector.broadcast %160 : f32 to vector<22x16xf32>
    %392 = arith.mulf %188, %391 : vector<22x16xf32>
    %393 = arith.addf %390, %392 : vector<22x16xf32>
    %394 = arith.addf %381, %393 : vector<22x16xf32>
    %395 = vector.broadcast %113 : f32 to vector<22x16xf32>
    %396 = arith.mulf %176, %395 : vector<22x16xf32>
    %397 = vector.broadcast %162 : f32 to vector<22x16xf32>
    %398 = arith.mulf %183, %397 : vector<22x16xf32>
    %399 = arith.addf %396, %398 : vector<22x16xf32>
    %400 = vector.broadcast %114 : f32 to vector<22x16xf32>
    %401 = arith.mulf %177, %400 : vector<22x16xf32>
    %402 = vector.broadcast %163 : f32 to vector<22x16xf32>
    %403 = arith.mulf %184, %402 : vector<22x16xf32>
    %404 = arith.addf %401, %403 : vector<22x16xf32>
    %405 = vector.broadcast %115 : f32 to vector<22x16xf32>
    %406 = arith.mulf %178, %405 : vector<22x16xf32>
    %407 = arith.addf %399, %406 : vector<22x16xf32>
    %408 = vector.broadcast %164 : f32 to vector<22x16xf32>
    %409 = arith.mulf %185, %408 : vector<22x16xf32>
    %410 = arith.addf %407, %409 : vector<22x16xf32>
    %411 = vector.broadcast %117 : f32 to vector<22x16xf32>
    %412 = arith.mulf %180, %411 : vector<22x16xf32>
    %413 = arith.addf %410, %412 : vector<22x16xf32>
    %414 = vector.broadcast %166 : f32 to vector<22x16xf32>
    %415 = arith.mulf %187, %414 : vector<22x16xf32>
    %416 = arith.addf %413, %415 : vector<22x16xf32>
    %417 = vector.broadcast %119 : f32 to vector<22x16xf32>
    %418 = arith.mulf %182, %417 : vector<22x16xf32>
    %419 = arith.addf %416, %418 : vector<22x16xf32>
    %420 = vector.broadcast %168 : f32 to vector<22x16xf32>
    %421 = arith.mulf %189, %420 : vector<22x16xf32>
    %422 = arith.addf %419, %421 : vector<22x16xf32>
    %423 = vector.broadcast %116 : f32 to vector<22x16xf32>
    %424 = arith.mulf %179, %423 : vector<22x16xf32>
    %425 = arith.addf %404, %424 : vector<22x16xf32>
    %426 = vector.broadcast %165 : f32 to vector<22x16xf32>
    %427 = arith.mulf %186, %426 : vector<22x16xf32>
    %428 = arith.addf %425, %427 : vector<22x16xf32>
    %429 = vector.broadcast %118 : f32 to vector<22x16xf32>
    %430 = arith.mulf %181, %429 : vector<22x16xf32>
    %431 = arith.addf %428, %430 : vector<22x16xf32>
    %432 = vector.broadcast %167 : f32 to vector<22x16xf32>
    %433 = arith.mulf %188, %432 : vector<22x16xf32>
    %434 = arith.addf %431, %433 : vector<22x16xf32>
    %435 = arith.addf %422, %434 : vector<22x16xf32>
    %436 = vector.broadcast %120 : f32 to vector<22x16xf32>
    %437 = arith.mulf %176, %436 : vector<22x16xf32>
    %438 = vector.broadcast %169 : f32 to vector<22x16xf32>
    %439 = arith.mulf %183, %438 : vector<22x16xf32>
    %440 = arith.addf %437, %439 : vector<22x16xf32>
    %441 = vector.broadcast %121 : f32 to vector<22x16xf32>
    %442 = arith.mulf %177, %441 : vector<22x16xf32>
    %443 = vector.broadcast %170 : f32 to vector<22x16xf32>
    %444 = arith.mulf %184, %443 : vector<22x16xf32>
    %445 = arith.addf %442, %444 : vector<22x16xf32>
    %446 = vector.broadcast %122 : f32 to vector<22x16xf32>
    %447 = arith.mulf %178, %446 : vector<22x16xf32>
    %448 = arith.addf %440, %447 : vector<22x16xf32>
    %449 = vector.broadcast %171 : f32 to vector<22x16xf32>
    %450 = arith.mulf %185, %449 : vector<22x16xf32>
    %451 = arith.addf %448, %450 : vector<22x16xf32>
    %452 = vector.broadcast %124 : f32 to vector<22x16xf32>
    %453 = arith.mulf %180, %452 : vector<22x16xf32>
    %454 = arith.addf %451, %453 : vector<22x16xf32>
    %455 = vector.broadcast %173 : f32 to vector<22x16xf32>
    %456 = arith.mulf %187, %455 : vector<22x16xf32>
    %457 = arith.addf %454, %456 : vector<22x16xf32>
    %458 = vector.broadcast %126 : f32 to vector<22x16xf32>
    %459 = arith.mulf %182, %458 : vector<22x16xf32>
    %460 = arith.addf %457, %459 : vector<22x16xf32>
    %461 = vector.broadcast %175 : f32 to vector<22x16xf32>
    %462 = arith.mulf %189, %461 : vector<22x16xf32>
    %463 = arith.addf %460, %462 : vector<22x16xf32>
    %464 = vector.broadcast %123 : f32 to vector<22x16xf32>
    %465 = arith.mulf %179, %464 : vector<22x16xf32>
    %466 = arith.addf %445, %465 : vector<22x16xf32>
    %467 = vector.broadcast %172 : f32 to vector<22x16xf32>
    %468 = arith.mulf %186, %467 : vector<22x16xf32>
    %469 = arith.addf %466, %468 : vector<22x16xf32>
    %470 = vector.broadcast %125 : f32 to vector<22x16xf32>
    %471 = arith.mulf %181, %470 : vector<22x16xf32>
    %472 = arith.addf %469, %471 : vector<22x16xf32>
    %473 = vector.broadcast %174 : f32 to vector<22x16xf32>
    %474 = arith.mulf %188, %473 : vector<22x16xf32>
    %475 = arith.addf %472, %474 : vector<22x16xf32>
    %476 = arith.addf %463, %475 : vector<22x16xf32>
    %477 = vector.extract_strided_slice %230 {offsets = [0, 0], sizes = [16, 16], strides = [1, 1]} : vector<22x16xf32> to vector<16x16xf32>
    %478 = vector.extract_strided_slice %271 {offsets = [1, 0], sizes = [16, 16], strides = [1, 1]} : vector<22x16xf32> to vector<16x16xf32>
    %479 = arith.addf %477, %478 : vector<16x16xf32>
    %480 = vector.extract_strided_slice %312 {offsets = [2, 0], sizes = [16, 16], strides = [1, 1]} : vector<22x16xf32> to vector<16x16xf32>
    %481 = vector.extract_strided_slice %353 {offsets = [3, 0], sizes = [16, 16], strides = [1, 1]} : vector<22x16xf32> to vector<16x16xf32>
    %482 = arith.addf %480, %481 : vector<16x16xf32>
    %483 = vector.extract_strided_slice %394 {offsets = [4, 0], sizes = [16, 16], strides = [1, 1]} : vector<22x16xf32> to vector<16x16xf32>
    %484 = vector.extract_strided_slice %435 {offsets = [5, 0], sizes = [16, 16], strides = [1, 1]} : vector<22x16xf32> to vector<16x16xf32>
    %485 = arith.addf %483, %484 : vector<16x16xf32>
    %486 = arith.addf %479, %482 : vector<16x16xf32>
    %487 = vector.extract_strided_slice %476 {offsets = [6, 0], sizes = [16, 16], strides = [1, 1]} : vector<22x16xf32> to vector<16x16xf32>
    %488 = arith.addf %485, %487 : vector<16x16xf32>
    %489 = arith.addf %486, %488 : vector<16x16xf32>
    %cst_79 = arith.constant 5.000000e-01 : f32
    %490 = vector.broadcast %cst_79 : f32 to vector<16x16xf32>
    %491 = arith.mulf %490, %489 : vector<16x16xf32>
    %492 = math.tanh %491 : vector<16x16xf32>
    %cst_80 = arith.constant 5.000000e-01 : f32
    %493 = vector.broadcast %cst_80 : f32 to vector<16x16xf32>
    %494 = arith.mulf %493, %492 : vector<16x16xf32>
    %cst_81 = arith.constant 5.000000e-01 : f32
    %495 = vector.broadcast %cst_81 : f32 to vector<16x16xf32>
    %496 = arith.addf %494, %495 : vector<16x16xf32>
    %497 = vector.extract_strided_slice %496 {offsets = [0, 0], sizes = [1, 16], strides = [1, 1]} : vector<16x16xf32> to vector<1x16xf32>
    %c0_82 = arith.constant 0 : index
    %c0_83 = arith.constant 0 : index
    %498 = vector.load %arg6[%c0_82, %c0_83] : memref<1x256xf32, #tpu.memory_space<vmem>>, vector<1x16xf32>
    tpu.vector_store %arg6[%c0_82, %c0_83], %497 {strides = array<i32>} : memref<1x256xf32, #tpu.memory_space<vmem>>, vector<1x16xf32>,
    %499 = vector.extract_strided_slice %496 {offsets = [1, 0], sizes = [1, 16], strides = [1, 1]} : vector<16x16xf32> to vector<1x16xf32>
    %c0_84 = arith.constant 0 : index
    %c16_85 = arith.constant 16 : index
    %500 = vector.load %arg6[%c0_84, %c16_85] : memref<1x256xf32, #tpu.memory_space<vmem>>, vector<1x16xf32>
    tpu.vector_store %arg6[%c0_84, %c16_85], %499 {strides = array<i32>} : memref<1x256xf32, #tpu.memory_space<vmem>>, vector<1x16xf32>,
    %501 = vector.extract_strided_slice %496 {offsets = [2, 0], sizes = [1, 16], strides = [1, 1]} : vector<16x16xf32> to vector<1x16xf32>
    %c0_86 = arith.constant 0 : index
    %c32_87 = arith.constant 32 : index
    %502 = vector.load %arg6[%c0_86, %c32_87] : memref<1x256xf32, #tpu.memory_space<vmem>>, vector<1x16xf32>
    tpu.vector_store %arg6[%c0_86, %c32_87], %501 {strides = array<i32>} : memref<1x256xf32, #tpu.memory_space<vmem>>, vector<1x16xf32>,
    %503 = vector.extract_strided_slice %496 {offsets = [3, 0], sizes = [1, 16], strides = [1, 1]} : vector<16x16xf32> to vector<1x16xf32>
    %c0_88 = arith.constant 0 : index
    %c48_89 = arith.constant 48 : index
    %504 = vector.load %arg6[%c0_88, %c48_89] : memref<1x256xf32, #tpu.memory_space<vmem>>, vector<1x16xf32>
    tpu.vector_store %arg6[%c0_88, %c48_89], %503 {strides = array<i32>} : memref<1x256xf32, #tpu.memory_space<vmem>>, vector<1x16xf32>,
    %505 = vector.extract_strided_slice %496 {offsets = [4, 0], sizes = [1, 16], strides = [1, 1]} : vector<16x16xf32> to vector<1x16xf32>
    %c0_90 = arith.constant 0 : index
    %c64_91 = arith.constant 64 : index
    %506 = vector.load %arg6[%c0_90, %c64_91] : memref<1x256xf32, #tpu.memory_space<vmem>>, vector<1x16xf32>
    tpu.vector_store %arg6[%c0_90, %c64_91], %505 {strides = array<i32>} : memref<1x256xf32, #tpu.memory_space<vmem>>, vector<1x16xf32>,
    %507 = vector.extract_strided_slice %496 {offsets = [5, 0], sizes = [1, 16], strides = [1, 1]} : vector<16x16xf32> to vector<1x16xf32>
    %c0_92 = arith.constant 0 : index
    %c80_93 = arith.constant 80 : index
    %508 = vector.load %arg6[%c0_92, %c80_93] : memref<1x256xf32, #tpu.memory_space<vmem>>, vector<1x16xf32>
    tpu.vector_store %arg6[%c0_92, %c80_93], %507 {strides = array<i32>} : memref<1x256xf32, #tpu.memory_space<vmem>>, vector<1x16xf32>,
    %509 = vector.extract_strided_slice %496 {offsets = [6, 0], sizes = [1, 16], strides = [1, 1]} : vector<16x16xf32> to vector<1x16xf32>
    %c0_94 = arith.constant 0 : index
    %c96_95 = arith.constant 96 : index
    %510 = vector.load %arg6[%c0_94, %c96_95] : memref<1x256xf32, #tpu.memory_space<vmem>>, vector<1x16xf32>
    tpu.vector_store %arg6[%c0_94, %c96_95], %509 {strides = array<i32>} : memref<1x256xf32, #tpu.memory_space<vmem>>, vector<1x16xf32>,
    %511 = vector.extract_strided_slice %496 {offsets = [7, 0], sizes = [1, 16], strides = [1, 1]} : vector<16x16xf32> to vector<1x16xf32>
    %c0_96 = arith.constant 0 : index
    %c112 = arith.constant 112 : index
    %512 = vector.load %arg6[%c0_96, %c112] : memref<1x256xf32, #tpu.memory_space<vmem>>, vector<1x16xf32>
    tpu.vector_store %arg6[%c0_96, %c112], %511 {strides = array<i32>} : memref<1x256xf32, #tpu.memory_space<vmem>>, vector<1x16xf32>,
    %513 = vector.extract_strided_slice %496 {offsets = [8, 0], sizes = [1, 16], strides = [1, 1]} : vector<16x16xf32> to vector<1x16xf32>
    %c0_97 = arith.constant 0 : index
    %c128 = arith.constant 128 : index
    %514 = vector.load %arg6[%c0_97, %c128] : memref<1x256xf32, #tpu.memory_space<vmem>>, vector<1x16xf32>
    tpu.vector_store %arg6[%c0_97, %c128], %513 {strides = array<i32>} : memref<1x256xf32, #tpu.memory_space<vmem>>, vector<1x16xf32>,
    %515 = vector.extract_strided_slice %496 {offsets = [9, 0], sizes = [1, 16], strides = [1, 1]} : vector<16x16xf32> to vector<1x16xf32>
    %c0_98 = arith.constant 0 : index
    %c144 = arith.constant 144 : index
    %516 = vector.load %arg6[%c0_98, %c144] : memref<1x256xf32, #tpu.memory_space<vmem>>, vector<1x16xf32>
    tpu.vector_store %arg6[%c0_98, %c144], %515 {strides = array<i32>} : memref<1x256xf32, #tpu.memory_space<vmem>>, vector<1x16xf32>,
    %517 = vector.extract_strided_slice %496 {offsets = [10, 0], sizes = [1, 16], strides = [1, 1]} : vector<16x16xf32> to vector<1x16xf32>
    %c0_99 = arith.constant 0 : index
    %c160 = arith.constant 160 : index
    %518 = vector.load %arg6[%c0_99, %c160] : memref<1x256xf32, #tpu.memory_space<vmem>>, vector<1x16xf32>
    tpu.vector_store %arg6[%c0_99, %c160], %517 {strides = array<i32>} : memref<1x256xf32, #tpu.memory_space<vmem>>, vector<1x16xf32>,
    %519 = vector.extract_strided_slice %496 {offsets = [11, 0], sizes = [1, 16], strides = [1, 1]} : vector<16x16xf32> to vector<1x16xf32>
    %c0_100 = arith.constant 0 : index
    %c176 = arith.constant 176 : index
    %520 = vector.load %arg6[%c0_100, %c176] : memref<1x256xf32, #tpu.memory_space<vmem>>, vector<1x16xf32>
    tpu.vector_store %arg6[%c0_100, %c176], %519 {strides = array<i32>} : memref<1x256xf32, #tpu.memory_space<vmem>>, vector<1x16xf32>,
    %521 = vector.extract_strided_slice %496 {offsets = [12, 0], sizes = [1, 16], strides = [1, 1]} : vector<16x16xf32> to vector<1x16xf32>
    %c0_101 = arith.constant 0 : index
    %c192 = arith.constant 192 : index
    %522 = vector.load %arg6[%c0_101, %c192] : memref<1x256xf32, #tpu.memory_space<vmem>>, vector<1x16xf32>
    tpu.vector_store %arg6[%c0_101, %c192], %521 {strides = array<i32>} : memref<1x256xf32, #tpu.memory_space<vmem>>, vector<1x16xf32>,
    %523 = vector.extract_strided_slice %496 {offsets = [13, 0], sizes = [1, 16], strides = [1, 1]} : vector<16x16xf32> to vector<1x16xf32>
    %c0_102 = arith.constant 0 : index
    %c208 = arith.constant 208 : index
    %524 = vector.load %arg6[%c0_102, %c208] : memref<1x256xf32, #tpu.memory_space<vmem>>, vector<1x16xf32>
    tpu.vector_store %arg6[%c0_102, %c208], %523 {strides = array<i32>} : memref<1x256xf32, #tpu.memory_space<vmem>>, vector<1x16xf32>,
    %525 = vector.extract_strided_slice %496 {offsets = [14, 0], sizes = [1, 16], strides = [1, 1]} : vector<16x16xf32> to vector<1x16xf32>
    %c0_103 = arith.constant 0 : index
    %c224 = arith.constant 224 : index
    %526 = vector.load %arg6[%c0_103, %c224] : memref<1x256xf32, #tpu.memory_space<vmem>>, vector<1x16xf32>
    tpu.vector_store %arg6[%c0_103, %c224], %525 {strides = array<i32>} : memref<1x256xf32, #tpu.memory_space<vmem>>, vector<1x16xf32>,
    %527 = vector.extract_strided_slice %496 {offsets = [15, 0], sizes = [1, 16], strides = [1, 1]} : vector<16x16xf32> to vector<1x16xf32>
    %c0_104 = arith.constant 0 : index
    %c240 = arith.constant 240 : index
    %528 = vector.load %arg6[%c0_104, %c240] : memref<1x256xf32, #tpu.memory_space<vmem>>, vector<1x16xf32>
    tpu.vector_store %arg6[%c0_104, %c240], %527 {strides = array<i32>} : memref<1x256xf32, #tpu.memory_space<vmem>>, vector<1x16xf32>,
    %c0_105 = arith.constant 0 : index
    %c0_106 = arith.constant 0 : index
    %529 = vector.load %arg6[%c0_105, %c0_106] : memref<1x256xf32, #tpu.memory_space<vmem>>, vector<1x256xf32>
    %530 = vector.broadcast %529 : vector<1x256xf32> to vector<4x256xf32>
    %531 = arith.mulf %1, %530 : vector<4x256xf32>
    %c0_107 = arith.constant 0 : index
    %c0_108 = arith.constant 0 : index
    %c0_109 = arith.constant 0 : index
    %532 = vector.load %arg3[%c0_107, %c0_108, %c0_109] : memref<1x4x256xf32, #tpu.memory_space<vmem>>, vector<1x4x256xf32>
    %533 = vector.shape_cast %532 : vector<1x4x256xf32> to vector<4x256xf32>
    %534 = vector.shape_cast %531 : vector<4x256xf32> to vector<1x4x256xf32>
    tpu.vector_store %arg3[%c0_107, %c0_108, %c0_109], %534 {strides = array<i32>} : memref<1x4x256xf32, #tpu.memory_space<vmem>>, vector<1x4x256xf32>,
    return
  }
  func.func @transform_0(%arg0: i32) -> i32 {
    %c0_i32 = arith.constant 0 : i32
    %c0_i32_0 = arith.constant 0 : i32
    return %c0_i32 : i32
  }
  func.func @transform_1(%arg0: i32) -> (i32, i32, i32) {
    %c0_i32 = arith.constant 0 : i32
    %c0_i32_0 = arith.constant 0 : i32
    %c0_i32_1 = arith.constant 0 : i32
    return %arg0, %c0_i32, %c0_i32_0 : i32, i32, i32
  }
  func.func @transform_2(%arg0: i32) -> (i32, i32, i32) {
    %c0_i32 = arith.constant 0 : i32
    %c0_i32_0 = arith.constant 0 : i32
    %c0_i32_1 = arith.constant 0 : i32
    return %arg0, %c0_i32, %c0_i32_0 : i32, i32, i32
  }
}

</mosaic_0001>

<llo_original>
// kernel: tpu_custom_call.1
$region0: #{tpu_custom_call.1}
  #allocation0 [shape = 'u32[]', space=smem, size = 0x4, offset = 0x4, fixed_abs, tag = 'smem constant byte address 0x4 - core index']
  #allocation1 [shape = 'u32[144,128]{1,0:T(1,128)}', space=vmem, size = 0x12000, scoped, tag = 'internal scratch']
  #allocation2 [shape = 'f32[22,22]{1,0:T(8,128)}', space=vmem, size = 0x3000, scoped, tag = 'scratch operand']
  #allocation3 [shape = 'f32[22,22]{1,0:T(8,128)}', space=vmem, size = 0x3000, scoped, tag = 'scratch operand']
  #allocation4 [shape = 'f32[1,256]{1,0:T(1,128)}', space=vmem, size = 0x400, scoped, tag = 'scratch operand']
  %s0 = inlined_call_operand.hbm [shape: f32[98], index: 0, kind: input, shape index: {}]
  %s1 = inlined_call_operand.hbm [shape: f32[2,4,256], index: 1, kind: input, shape index: {}]
  %s2 = inlined_call_operand.hbm [shape: f32[2,4,256], index: 2, kind: output, shape index: {}]
  %s3 = sld [smem:[#allocation0]]
  $region49: #{tpu_custom_call.1} parent=0
    _
  %s5 = ssub.s32 1, %s3
  %s6 = scalar_select 0, %s5, %s3
  $region1: #{tpu_custom_call.1} parent=0
    #allocation5 [shape = 'u8[512]{0}', space=smem, size = 0x200, scoped, tag = 'input window, operand 0, single buffered']
    #allocation6 [shape = 's32[2]{0}', space=sflag, size = 0x8, scoped, tag = 'scoped memory for tpu_custom_call.1']
    #allocation7 [shape = 's32[2]{0}', space=sflag, size = 0x8, scoped, tag = 'scoped memory for tpu_custom_call.1']
    #allocation8 [shape = 's32[2]{0}', space=sflag, size = 0x8, scoped, tag = 'scoped memory for tpu_custom_call.1']
    #allocation9 [shape = 'u8[8192]{0}', space=vmem, size = 0x2000, scoped, tag = 'input window, operand 1']
    #allocation10 [shape = 'u8[8192]{0}', space=vmem, size = 0x2000, scoped, tag = 'output window, operand 0']
    %7 = vsyncpa [#allocation8], 0
    %8 = vsyncpa [#allocation6], 0
    %s9 = scalar_lea.sflag [#allocation6], 1
    %10 = vsyncpa %s9, 0
    %11 = vsyncpa [#allocation7], 0
    %s12 = scalar_lea.sflag [#allocation7], 1
    %13 = vsyncpa %s12, 0
    loop: start=0, step=1, limit=4
    $region2: #{tpu_custom_call.1} parent=1 // loop_pre_header
      _
    $region3: #{tpu_custom_call.1} parent=1 // loop_header
      %s15 = sphi 0, %s19
      %p16 = scmp.ge.s32.totalorder %s15, 4
      %s23 = sphi 0, %s23
      %s25 = sphi 0, %s23
      %s26 = sphi 0, %s25
      %s40 = sphi 0, %s26
      %s46 = sphi 0, %s48
      %s49 = sphi 0, %s46
      %s50 = sphi 0, %s49
      %s66 = sphi 0, %s50
      %s72 = sphi 0, %s74
      %s75 = sphi 0, %s72
      %s76 = sphi 0, %s75
      %s92 = sphi 0, %s76
    $region4: #{tpu_custom_call.1} parent=1 // loop_header_branch
      %18 = sbr.rel (%p16) target = $region8
    $region5: #{tpu_custom_call.1} parent=1 // loop_body
      %s20 = ssub.s32 %s15, 1
      %s21 = ssub.s32 %s15, 2
      %s22 = sadd.s32 %s15, 1
      %s24 = sadd.s32 %s23, 1
      %p27 = scmp.eq.s32.totalorder %s15, 1
      %p28 = scmp.ne.s32.totalorder %s23, %s25
      %p29 = scmp.eq.s32.totalorder %s15, 0
      %p30 = por %p28, %p29
      %p31 = scmp.ne.s32.totalorder %s23, %s25
      %p32 = scmp.eq.s32.totalorder %s20, 1
      %p33 = por %p31, %p32
      %p34 = scmp.ne.s32.totalorder %s25, %s26
      %p35 = scmp.eq.s32.totalorder %s20, 0
      %p36 = por %p34, %p35
      %p37 = scmp.ne.s32.totalorder %s25, %s26
      %p38 = scmp.eq.s32.totalorder %s21, 1
      %p39 = por %p37, %p38
      %p41 = scmp.ne.s32.totalorder %s26, %s40
      %p42 = scmp.eq.s32.totalorder %s21, 0
      %p43 = por %p41, %p42
      %s44 = ssub.s32 %s15, %s22
      %p45 = scmp.eq.s32.totalorder %s44, 0
      %s47 = sadd.s32 %s46, 1
      %s48 = scalar_select %p45, %s46, %s47
      %p51 = pneg %p45
      %p52 = scmp.eq.s32.totalorder %s15, 1
      %p53 = por %p51, %p52
      %p54 = scmp.ne.s32.totalorder %s46, %s49
      %p55 = scmp.eq.s32.totalorder %s15, 0
      %p56 = por %p54, %p55
      %p57 = scmp.ne.s32.totalorder %s46, %s49
      %p58 = scmp.eq.s32.totalorder %s20, 1
      %p59 = por %p57, %p58
      %p60 = scmp.ne.s32.totalorder %s49, %s50
      %p61 = scmp.eq.s32.totalorder %s20, 0
      %p62 = por %p60, %p61
      %p63 = scmp.ne.s32.totalorder %s49, %s50
      %p64 = scmp.eq.s32.totalorder %s21, 1
      %p65 = por %p63, %p64
      %p67 = scmp.ne.s32.totalorder %s50, %s66
      %p68 = scmp.eq.s32.totalorder %s21, 0
      %p69 = por %p67, %p68
      %s70 = ssub.s32 %s15, %s22
      %p71 = scmp.eq.s32.totalorder %s70, 0
      %s73 = sadd.s32 %s72, 1
      %s74 = scalar_select %p71, %s72, %s73
      %p77 = pneg %p71
      %p78 = scmp.eq.s32.totalorder %s15, 1
      %p79 = por %p77, %p78
      %p80 = scmp.ne.s32.totalorder %s72, %s75
      %p81 = scmp.eq.s32.totalorder %s15, 0
      %p82 = por %p80, %p81
      %p83 = scmp.ne.s32.totalorder %s72, %s75
      %p84 = scmp.eq.s32.totalorder %s20, 1
      %p85 = por %p83, %p84
      %p86 = scmp.ne.s32.totalorder %s75, %s76
      %p87 = scmp.eq.s32.totalorder %s20, 0
      %p88 = por %p86, %p87
      %p89 = scmp.ne.s32.totalorder %s75, %s76
      %p90 = scmp.eq.s32.totalorder %s21, 1
      %p91 = por %p89, %p90
      %p93 = scmp.ne.s32.totalorder %s76, %s92
      %p94 = scmp.eq.s32.totalorder %s21, 0
      %p95 = por %p93, %p94
      %p96 = scmp.le.s32.totalorder 1, %s15
      %p97 = scmp.lt.s32.totalorder %s15, 3
      %p98 = pnand %p96, %p97
      %p99 = pneg %p98
      // Predicated region
      $region9: #{tpu_custom_call.1} parent=5 // pred_check
        _
      $region10: #{tpu_custom_call.1} parent=5 // pred_check_branch
        %101 = sbr.rel (%p98) target = $region12
      $region11: #{tpu_custom_call.1} parent=5 // pred_region
        %s102 = ssub.s32 %s15, 1
        // Predicated region
        $region13: #{tpu_custom_call.1} parent=11 // pred_check
          %p103 = pneg %p36
        $region14: #{tpu_custom_call.1} parent=11 // pred_check_branch
          %105 = sbr.rel (%p103) target = $region16
        $region15: #{tpu_custom_call.1} parent=11 // pred_region
          %s107 = ssub.s32 16, 16
          %108 = vsyncadd [#allocation8], %s107
          %111 = dma.hbm_to_smem %s0, 16, [#allocation5], [#allocation8]
        $region16: #{tpu_custom_call.1} parent=11 // pred_fallthru
          _
      $region12: #{tpu_custom_call.1} parent=5 // pred_fallthru
        _
      %p112 = scmp.lt.s32.totalorder %s15, 2
      // Predicated region
      $region17: #{tpu_custom_call.1} parent=5 // pred_check
        %p113 = pneg %p112
      $region18: #{tpu_custom_call.1} parent=5 // pred_check_branch
        %115 = sbr.rel (%p113) target = $region20
      $region19: #{tpu_custom_call.1} parent=5 // pred_region
        // Predicated region
        $region21: #{tpu_custom_call.1} parent=19 // pred_check
          %p116 = pneg %p56
        $region22: #{tpu_custom_call.1} parent=19 // pred_check_branch
          %118 = sbr.rel (%p116) target = $region24
        $region23: #{tpu_custom_call.1} parent=19 // pred_region
          %s119 = sand.u32 %s46, 1
          %s120 = scalar_lea.sflag [#allocation6], %s119
          %s121 = sand.u32 %s46, 1
          %s122 = smul.addr %s121, 8
          %s123 = scalar_lea.vmem [#allocation9], %s122
          %s125 = ssub.s32 128, 128
          %126 = vsyncadd %s120, %s125
          %s127 = smul.addr %s15, 2
          %s128 = smul.addr %s127, 64
          %s129 = scalar_lea.hbm %s1, %s128
          %s131 = sshll.u32 %s123, 4
          %s132 = int_to_ptr.vmem [resolvable:$true] %s131
          %134 = dma.hbm_to_vmem [thread:$0]  %s129, 128, %s132, %s120
        $region24: #{tpu_custom_call.1} parent=19 // pred_fallthru
          _
      $region20: #{tpu_custom_call.1} parent=5 // pred_fallthru
        _
      %p135 = scmp.le.s32.totalorder 1, %s15
      %p136 = scmp.lt.s32.totalorder %s15, 3
      %p137 = pnand %p135, %p136
      %p138 = pneg %p137
      // Predicated region
      $region25: #{tpu_custom_call.1} parent=5 // pred_check
        _
      $region26: #{tpu_custom_call.1} parent=5 // pred_check_branch
        %140 = sbr.rel (%p137) target = $region28
      $region27: #{tpu_custom_call.1} parent=5 // pred_region
        %s141 = ssub.s32 %s15, 1
        // Predicated region
        $region29: #{tpu_custom_call.1} parent=27 // pred_check
          %p142 = pneg %p36
        $region30: #{tpu_custom_call.1} parent=27 // pred_check_branch
          %144 = sbr.rel (%p142) target = $region32
        $region31: #{tpu_custom_call.1} parent=27 // pred_region
          %145 = dma.done [#allocation8], 16
        $region32: #{tpu_custom_call.1} parent=27 // pred_fallthru
          _
        %s146 = sand.u32 %s49, 1
        %s147 = scalar_lea.sflag [#allocation6], %s146
        %s148 = sand.u32 %s49, 1
        %s149 = smul.addr %s148, 8
        %s150 = scalar_lea.vmem [#allocation9], %s149
        // Predicated region
        $region33: #{tpu_custom_call.1} parent=27 // pred_check
          %p151 = pneg %p62
        $region34: #{tpu_custom_call.1} parent=27 // pred_check_branch
          %153 = sbr.rel (%p151) target = $region36
        $region35: #{tpu_custom_call.1} parent=27 // pred_region
          %154 = dma.done %s147, 128
        $region36: #{tpu_custom_call.1} parent=27 // pred_fallthru
          _
        %155 = sfence
        %p156 = pneg %p36
        %p157 = pneg %p33
        %s158 = sand.u32 %s49, 1
        %s159 = scalar_lea.sflag [#allocation6], %s158
        %s160 = sand.u32 %s49, 1
        %s161 = smul.addr %s160, 8
        %s162 = scalar_lea.vmem [#allocation9], %s161
        %p163 = pneg %p62
        %p164 = pneg %p59
        %p165 = pneg %p88
        %p166 = pneg %p85
        %s167 = sand.u32 %s75, 1
        %s168 = scalar_lea.sflag [#allocation7], %s167
        %s169 = sand.u32 %s75, 1
        %s170 = smul.addr %s169, 8
        %s171 = scalar_lea.vmem [#allocation10], %s170
        %v172 = vld [vmem:[%s150] sm:$0xff]
        %v174 = vcombine.high %v172, %v172
        %vm176 = vcmask 1043456
        %v177 = vsel %vm176, %v172, -inf
        %v178 = vrot.slane %v177, 4
        %v179 = vmax.f32 %v177, %v178
        %v180 = vrot.slane %v179, 2
        %v181 = vmax.f32 %v179, %v180
        %v182 = vrot.slane %v181, 1
        %v183 = vmax.f32 %v181, %v182
        %v184 = vsel %vm176, %v174, -inf
        %v185 = vrot.slane %v184, 4
        %v186 = vmax.f32 %v184, %v185
        %v187 = vrot.slane %v186, 2
        %v188 = vmax.f32 %v186, %v187
        %v189 = vrot.slane %v188, 1
        %v190 = vmax.f32 %v188, %v189
        %v191 = vsel %vm176, %v172, 0.0
        %v192 = vrot.slane %v191, 4
        %v193 = vadd.f32 %v191, %v192
        %v194 = vrot.slane %v193, 2
        %v195 = vadd.f32 %v193, %v194
        %v196 = vrot.slane %v195, 1
        %v197 = vadd.f32 %v195, %v196
        %v198 = vsel %vm176, %v174, 0.0
        %v199 = vrot.slane %v198, 4
        %v200 = vadd.f32 %v198, %v199
        %v201 = vrot.slane %v200, 2
        %v202 = vadd.f32 %v200, %v201
        %v203 = vrot.slane %v202, 1
        %v204 = vadd.f32 %v202, %v203
        %v205 = vmul.f32 %v197, 0.25
        %v206 = vmul.f32 %v204, 0.25
        %vm207 = vcmask 179200
        %208 = vst.msk [vmem:[#allocation2] sm:$0xff] %vm207, 0.0
        %209 = vst.msk [vmem:[#allocation2 + $0x8] sm:$0xff] %vm207, 0.0
        %vm210 = vcmask 177152
        %211 = vst.msk [vmem:[#allocation2 + $0x10] sm:$0x3f] %vm210, 0.0
        %212 = vst.msk [vmem:[#allocation3] sm:$0xff] %vm207, 0.0
        %213 = vst.msk [vmem:[#allocation3 + $0x8] sm:$0xff] %vm207, 0.0
        %214 = vst.msk [vmem:[#allocation3 + $0x10] sm:$0x3f] %vm210, 0.0
        %216 = vrot.lane.b32.xlu0 %v183, 3
        %v217 = vpop.permute.xlu0 %216
        %vm219 = vcmask 147480
        %220 = vst.msk [vmem:[#allocation2 + $0x3] sm:$0x1] %vm219, %v217
        %222 = vrot.lane.b32.xlu0 %v205, 3
        %v223 = vpop.permute.xlu0 %222
        %225 = vst.msk [vmem:[#allocation3 + $0x3] sm:$0x1] %vm219, %v223
        %226 = vrot.lane.b32.xlu0 %v183, 115
        %v227 = vpop.permute.xlu0 %226
        %229 = vst.msk [vmem:[#allocation2 + $0x4] sm:$0x1] %vm219, %v227
        %230 = vrot.lane.b32.xlu0 %v205, 115
        %v231 = vpop.permute.xlu0 %230
        %233 = vst.msk [vmem:[#allocation3 + $0x4] sm:$0x1] %vm219, %v231
        %234 = vrot.lane.b32.xlu0 %v183, 99
        %v235 = vpop.permute.xlu0 %234
        %237 = vst.msk [vmem:[#allocation2 + $0x5] sm:$0x1] %vm219, %v235
        %238 = vrot.lane.b32.xlu0 %v205, 99
        %v239 = vpop.permute.xlu0 %238
        %241 = vst.msk [vmem:[#allocation3 + $0x5] sm:$0x1] %vm219, %v239
        %242 = vrot.lane.b32.xlu0 %v183, 83
        %v243 = vpop.permute.xlu0 %242
        %245 = vst.msk [vmem:[#allocation2 + $0x6] sm:$0x1] %vm219, %v243
        %246 = vrot.lane.b32.xlu0 %v205, 83
        %v247 = vpop.permute.xlu0 %246
        %249 = vst.msk [vmem:[#allocation3 + $0x6] sm:$0x1] %vm219, %v247
        %250 = vrot.lane.b32.xlu0 %v183, 67
        %v251 = vpop.permute.xlu0 %250
        %253 = vst.msk [vmem:[#allocation2 + $0x7] sm:$0x1] %vm219, %v251
        %254 = vrot.lane.b32.xlu0 %v205, 67
        %v255 = vpop.permute.xlu0 %254
        %257 = vst.msk [vmem:[#allocation3 + $0x7] sm:$0x1] %vm219, %v255
        %258 = vrot.lane.b32.xlu0 %v183, 51
        %v259 = vpop.permute.xlu0 %258
        %261 = vst.msk [vmem:[#allocation2 + $0x8] sm:$0x1] %vm219, %v259
        %262 = vrot.lane.b32.xlu0 %v205, 51
        %v263 = vpop.permute.xlu0 %262
        %265 = vst.msk [vmem:[#allocation3 + $0x8] sm:$0x1] %vm219, %v263
        %266 = vrot.lane.b32.xlu0 %v183, 35
        %v267 = vpop.permute.xlu0 %266
        %269 = vst.msk [vmem:[#allocation2 + $0x9] sm:$0x1] %vm219, %v267
        %270 = vrot.lane.b32.xlu0 %v205, 35
        %v271 = vpop.permute.xlu0 %270
        %273 = vst.msk [vmem:[#allocation3 + $0x9] sm:$0x1] %vm219, %v271
        %274 = vrot.lane.b32.xlu0 %v183, 19
        %v275 = vpop.permute.xlu0 %274
        %277 = vst.msk [vmem:[#allocation2 + $0xa] sm:$0x1] %vm219, %v275
        %278 = vrot.lane.b32.xlu0 %v205, 19
        %v279 = vpop.permute.xlu0 %278
        %281 = vst.msk [vmem:[#allocation3 + $0xa] sm:$0x1] %vm219, %v279
        %283 = vrot.lane.b32.xlu0 %v190, 3
        %v284 = vpop.permute.xlu0 %283
        %286 = vst.msk [vmem:[#allocation2 + $0xb] sm:$0x1] %vm219, %v284
        %288 = vrot.lane.b32.xlu0 %v206, 3
        %v289 = vpop.permute.xlu0 %288
        %291 = vst.msk [vmem:[#allocation3 + $0xb] sm:$0x1] %vm219, %v289
        %292 = vrot.lane.b32.xlu0 %v190, 115
        %v293 = vpop.permute.xlu0 %292
        %295 = vst.msk [vmem:[#allocation2 + $0xc] sm:$0x1] %vm219, %v293
        %296 = vrot.lane.b32.xlu0 %v206, 115
        %v297 = vpop.permute.xlu0 %296
        %299 = vst.msk [vmem:[#allocation3 + $0xc] sm:$0x1] %vm219, %v297
        %300 = vrot.lane.b32.xlu0 %v190, 99
        %v301 = vpop.permute.xlu0 %300
        %303 = vst.msk [vmem:[#allocation2 + $0xd] sm:$0x1] %vm219, %v301
        %304 = vrot.lane.b32.xlu0 %v206, 99
        %v305 = vpop.permute.xlu0 %304
        %307 = vst.msk [vmem:[#allocation3 + $0xd] sm:$0x1] %vm219, %v305
        %308 = vrot.lane.b32.xlu0 %v190, 83
        %v309 = vpop.permute.xlu0 %308
        %311 = vst.msk [vmem:[#allocation2 + $0xe] sm:$0x1] %vm219, %v309
        %312 = vrot.lane.b32.xlu0 %v206, 83
        %v313 = vpop.permute.xlu0 %312
        %315 = vst.msk [vmem:[#allocation3 + $0xe] sm:$0x1] %vm219, %v313
        %316 = vrot.lane.b32.xlu0 %v190, 67
        %v317 = vpop.permute.xlu0 %316
        %319 = vst.msk [vmem:[#allocation2 + $0xf] sm:$0x1] %vm219, %v317
        %320 = vrot.lane.b32.xlu0 %v206, 67
        %v321 = vpop.permute.xlu0 %320
        %323 = vst.msk [vmem:[#allocation3 + $0xf] sm:$0x1] %vm219, %v321
        %324 = vrot.lane.b32.xlu0 %v190, 51
        %v325 = vpop.permute.xlu0 %324
        %327 = vst.msk [vmem:[#allocation2 + $0x10] sm:$0x1] %vm219, %v325
        %328 = vrot.lane.b32.xlu0 %v206, 51
        %v329 = vpop.permute.xlu0 %328
        %331 = vst.msk [vmem:[#allocation3 + $0x10] sm:$0x1] %vm219, %v329
        %332 = vrot.lane.b32.xlu0 %v190, 35
        %v333 = vpop.permute.xlu0 %332
        %335 = vst.msk [vmem:[#allocation2 + $0x11] sm:$0x1] %vm219, %v333
        %336 = vrot.lane.b32.xlu0 %v206, 35
        %v337 = vpop.permute.xlu0 %336
        %339 = vst.msk [vmem:[#allocation3 + $0x11] sm:$0x1] %vm219, %v337
        %340 = vrot.lane.b32.xlu0 %v190, 19
        %v341 = vpop.permute.xlu0 %340
        %343 = vst.msk [vmem:[#allocation2 + $0x12] sm:$0x1] %vm219, %v341
        %344 = vrot.lane.b32.xlu0 %v206, 19
        %v345 = vpop.permute.xlu0 %344
        %347 = vst.msk [vmem:[#allocation3 + $0x12] sm:$0x1] %vm219, %v345
        %v348 = vld [vmem:[#allocation2] sm:$0xff]
        %v349 = vld [vmem:[#allocation2 + $0x8] sm:$0xff]
        %v350 = vld [vmem:[#allocation2 + $0x10] sm:$0x3f]
        %v351 = vld [vmem:[#allocation3] sm:$0xff]
        %v352 = vld [vmem:[#allocation3 + $0x8] sm:$0xff]
        %v353 = vld [vmem:[#allocation3 + $0x10] sm:$0x3f]
        %s354 = sld [smem:[#allocation5]]
        %s355 = sld [smem:[#allocation5 + $0x1]]
        %s356 = sld [smem:[#allocation5 + $0x2]]
        %s357 = sld [smem:[#allocation5 + $0x3]]
        %s358 = sld [smem:[#allocation5 + $0x4]]
        %s359 = sld [smem:[#allocation5 + $0x5]]
        %s360 = sld [smem:[#allocation5 + $0x6]]
        %s361 = sld [smem:[#allocation5 + $0x7]]
        %s362 = sld [smem:[#allocation5 + $0x8]]
        %s363 = sld [smem:[#allocation5 + $0x9]]
        %s364 = sld [smem:[#allocation5 + $0xa]]
        %s365 = sld [smem:[#allocation5 + $0xb]]
        %s366 = sld [smem:[#allocation5 + $0xc]]
        %s367 = sld [smem:[#allocation5 + $0xd]]
        %s368 = sld [smem:[#allocation5 + $0xe]]
        %s369 = sld [smem:[#allocation5 + $0xf]]
        %s370 = sld [smem:[#allocation5 + $0x10]]
        %s371 = sld [smem:[#allocation5 + $0x11]]
        %s372 = sld [smem:[#allocation5 + $0x12]]
        %s373 = sld [smem:[#allocation5 + $0x13]]
        %s374 = sld [smem:[#allocation5 + $0x14]]
        %s375 = sld [smem:[#allocation5 + $0x15]]
        %s376 = sld [smem:[#allocation5 + $0x16]]
        %s377 = sld [smem:[#allocation5 + $0x17]]
        %s378 = sld [smem:[#allocation5 + $0x18]]
        %s379 = sld [smem:[#allocation5 + $0x19]]
        %s380 = sld [smem:[#allocation5 + $0x1a]]
        %s381 = sld [smem:[#allocation5 + $0x1b]]
        %s382 = sld [smem:[#allocation5 + $0x1c]]
        %s383 = sld [smem:[#allocation5 + $0x1d]]
        %s384 = sld [smem:[#allocation5 + $0x1e]]
        %s385 = sld [smem:[#allocation5 + $0x1f]]
        %s386 = sld [smem:[#allocation5 + $0x20]]
        %s387 = sld [smem:[#allocation5 + $0x21]]
        %s388 = sld [smem:[#allocation5 + $0x22]]
        %s389 = sld [smem:[#allocation5 + $0x23]]
        %s390 = sld [smem:[#allocation5 + $0x24]]
        %s391 = sld [smem:[#allocation5 + $0x25]]
        %s392 = sld [smem:[#allocation5 + $0x26]]
        %s393 = sld [smem:[#allocation5 + $0x27]]
        %s394 = sld [smem:[#allocation5 + $0x28]]
        %s395 = sld [smem:[#allocation5 + $0x29]]
        %s396 = sld [smem:[#allocation5 + $0x2a]]
        %s397 = sld [smem:[#allocation5 + $0x2b]]
        %s398 = sld [smem:[#allocation5 + $0x2c]]
        %s399 = sld [smem:[#allocation5 + $0x2d]]
        %s400 = sld [smem:[#allocation5 + $0x2e]]
        %s401 = sld [smem:[#allocation5 + $0x2f]]
        %s402 = sld [smem:[#allocation5 + $0x30]]
        %s403 = sld [smem:[#allocation5 + $0x31]]
        %s404 = sld [smem:[#allocation5 + $0x32]]
        %s405 = sld [smem:[#allocation5 + $0x33]]
        %s406 = sld [smem:[#allocation5 + $0x34]]
        %s407 = sld [smem:[#allocation5 + $0x35]]
        %s408 = sld [smem:[#allocation5 + $0x36]]
        %s409 = sld [smem:[#allocation5 + $0x37]]
        %s410 = sld [smem:[#allocation5 + $0x38]]
        %s411 = sld [smem:[#allocation5 + $0x39]]
        %s412 = sld [smem:[#allocation5 + $0x3a]]
        %s413 = sld [smem:[#allocation5 + $0x3b]]
        %s414 = sld [smem:[#allocation5 + $0x3c]]
        %s415 = sld [smem:[#allocation5 + $0x3d]]
        %s416 = sld [smem:[#allocation5 + $0x3e]]
        %s417 = sld [smem:[#allocation5 + $0x3f]]
        %s418 = sld [smem:[#allocation5 + $0x40]]
        %s419 = sld [smem:[#allocation5 + $0x41]]
        %s420 = sld [smem:[#allocation5 + $0x42]]
        %s421 = sld [smem:[#allocation5 + $0x43]]
        %s422 = sld [smem:[#allocation5 + $0x44]]
        %s423 = sld [smem:[#allocation5 + $0x45]]
        %s424 = sld [smem:[#allocation5 + $0x46]]
        %s425 = sld [smem:[#allocation5 + $0x47]]
        %s426 = sld [smem:[#allocation5 + $0x48]]
        %s427 = sld [smem:[#allocation5 + $0x49]]
        %s428 = sld [smem:[#allocation5 + $0x4a]]
        %s429 = sld [smem:[#allocation5 + $0x4b]]
        %s430 = sld [smem:[#allocation5 + $0x4c]]
        %s431 = sld [smem:[#allocation5 + $0x4d]]
        %s432 = sld [smem:[#allocation5 + $0x4e]]
        %s433 = sld [smem:[#allocation5 + $0x4f]]
        %s434 = sld [smem:[#allocation5 + $0x50]]
        %s435 = sld [smem:[#allocation5 + $0x51]]
        %s436 = sld [smem:[#allocation5 + $0x52]]
        %s437 = sld [smem:[#allocation5 + $0x53]]
        %s438 = sld [smem:[#allocation5 + $0x54]]
        %s439 = sld [smem:[#allocation5 + $0x55]]
        %s440 = sld [smem:[#allocation5 + $0x56]]
        %s441 = sld [smem:[#allocation5 + $0x57]]
        %s442 = sld [smem:[#allocation5 + $0x58]]
        %s443 = sld [smem:[#allocation5 + $0x59]]
        %s444 = sld [smem:[#allocation5 + $0x5a]]
        %s445 = sld [smem:[#allocation5 + $0x5b]]
        %s446 = sld [smem:[#allocation5 + $0x5c]]
        %s447 = sld [smem:[#allocation5 + $0x5d]]
        %s448 = sld [smem:[#allocation5 + $0x5e]]
        %s449 = sld [smem:[#allocation5 + $0x5f]]
        %s450 = sld [smem:[#allocation5 + $0x60]]
        %s451 = sld [smem:[#allocation5 + $0x61]]
        %v452 = vstv %s354
        %v453 = vmul.f32 %v348, %v452
        %v454 = vmul.f32 %v349, %v452
        %v455 = vstv %s403
        %v456 = vmul.f32 %v351, %v455
        %v457 = vmul.f32 %v352, %v455
        %v458 = vadd.f32 %v453, %v456
        %v459 = vadd.f32 %v454, %v457
        %v460 = vstv %s355
        %v461 = vmul.f32 %v348, %v460
        %v462 = vmul.f32 %v349, %v460
        %v463 = vstv %s404
        %v464 = vmul.f32 %v351, %v463
        %v465 = vmul.f32 %v352, %v463
        %v466 = vadd.f32 %v461, %v464
        %v467 = vadd.f32 %v462, %v465
        %v468 = vstv %s356
        %v469 = vmul.f32 %v348, %v468
        %v470 = vmul.f32 %v349, %v468
        %473 = vrot.lane.b32.xlu0 %v469, 126
        %v474 = vpop.permute.xlu0 %473
        %475 = vrot.lane.b32.xlu0 %v470, 126
        %v476 = vpop.permute.xlu0 %475
        %v479 = vadd.f32 %v458, %v474
        %v480 = vadd.f32 %v459, %v476
        %v481 = vstv %s405
        %v482 = vmul.f32 %v351, %v481
        %v483 = vmul.f32 %v352, %v481
        %486 = vrot.lane.b32.xlu0 %v482, 126
        %v487 = vpop.permute.xlu0 %486
        %488 = vrot.lane.b32.xlu0 %v483, 126
        %v489 = vpop.permute.xlu0 %488
        %v492 = vadd.f32 %v479, %v487
        %v493 = vadd.f32 %v480, %v489
        %v494 = vstv %s358
        %v495 = vmul.f32 %v348, %v494
        %v496 = vmul.f32 %v349, %v494
        %499 = vrot.lane.b32.xlu0 %v495, 124
        %v500 = vpop.permute.xlu0 %499
        %501 = vrot.lane.b32.xlu0 %v496, 124
        %v502 = vpop.permute.xlu0 %501
        %v505 = vadd.f32 %v492, %v500
        %v506 = vadd.f32 %v493, %v502
        %v507 = vstv %s407
        %v508 = vmul.f32 %v351, %v507
        %v509 = vmul.f32 %v352, %v507
        %512 = vrot.lane.b32.xlu0 %v508, 124
        %v513 = vpop.permute.xlu0 %512
        %514 = vrot.lane.b32.xlu0 %v509, 124
        %v515 = vpop.permute.xlu0 %514
        %v518 = vadd.f32 %v505, %v513
        %v519 = vadd.f32 %v506, %v515
        %v520 = vstv %s360
        %v521 = vmul.f32 %v348, %v520
        %v522 = vmul.f32 %v349, %v520
        %525 = vrot.lane.b32.xlu0 %v521, 122
        %v526 = vpop.permute.xlu0 %525
        %527 = vrot.lane.b32.xlu0 %v522, 122
        %v528 = vpop.permute.xlu0 %527
        %v531 = vadd.f32 %v518, %v526
        %v532 = vadd.f32 %v519, %v528
        %v533 = vstv %s409
        %v534 = vmul.f32 %v351, %v533
        %v535 = vmul.f32 %v352, %v533
        %538 = vrot.lane.b32.xlu0 %v534, 122
        %v539 = vpop.permute.xlu0 %538
        %540 = vrot.lane.b32.xlu0 %v535, 122
        %v541 = vpop.permute.xlu0 %540
        %v544 = vadd.f32 %v531, %v539
        %v545 = vadd.f32 %v532, %v541
        %v546 = vstv %s357
        %v547 = vmul.f32 %v348, %v546
        %v548 = vmul.f32 %v349, %v546
        %551 = vrot.lane.b32.xlu0 %v547, 126
        %v552 = vpop.permute.xlu0 %551
        %553 = vrot.lane.b32.xlu0 %v548, 126
        %v554 = vpop.permute.xlu0 %553
        %v557 = vadd.f32 %v466, %v552
        %v558 = vadd.f32 %v467, %v554
        %v559 = vstv %s406
        %v560 = vmul.f32 %v351, %v559
        %v561 = vmul.f32 %v352, %v559
        %564 = vrot.lane.b32.xlu0 %v560, 126
        %v565 = vpop.permute.xlu0 %564
        %566 = vrot.lane.b32.xlu0 %v561, 126
        %v567 = vpop.permute.xlu0 %566
        %v570 = vadd.f32 %v557, %v565
        %v571 = vadd.f32 %v558, %v567
        %v572 = vstv %s359
        %v573 = vmul.f32 %v348, %v572
        %v574 = vmul.f32 %v349, %v572
        %577 = vrot.lane.b32.xlu0 %v573, 124
        %v578 = vpop.permute.xlu0 %577
        %579 = vrot.lane.b32.xlu0 %v574, 124
        %v580 = vpop.permute.xlu0 %579
        %v583 = vadd.f32 %v570, %v578
        %v584 = vadd.f32 %v571, %v580
        %v585 = vstv %s408
        %v586 = vmul.f32 %v351, %v585
        %v587 = vmul.f32 %v352, %v585
        %590 = vrot.lane.b32.xlu0 %v586, 124
        %v591 = vpop.permute.xlu0 %590
        %592 = vrot.lane.b32.xlu0 %v587, 124
        %v593 = vpop.permute.xlu0 %592
        %v596 = vadd.f32 %v583, %v591
        %v597 = vadd.f32 %v584, %v593
        %600 = vrot.lane.b32.xlu0 %v596, 127
        %v601 = vpop.permute.xlu0 %600
        %602 = vrot.lane.b32.xlu0 %v597, 127
        %v603 = vpop.permute.xlu0 %602
        %v606 = vadd.f32 %v544, %v601
        %v607 = vadd.f32 %v545, %v603
        %v608 = vstv %s361
        %v609 = vmul.f32 %v348, %v608
        %v610 = vmul.f32 %v349, %v608
        %v611 = vmul.f32 %v350, %v608
        %v612 = vstv %s410
        %v613 = vmul.f32 %v351, %v612
        %v614 = vmul.f32 %v352, %v612
        %v615 = vmul.f32 %v353, %v612
        %v616 = vadd.f32 %v609, %v613
        %v617 = vadd.f32 %v610, %v614
        %v618 = vadd.f32 %v611, %v615
        %v619 = vstv %s362
        %v620 = vmul.f32 %v348, %v619
        %v621 = vmul.f32 %v349, %v619
        %v622 = vmul.f32 %v350, %v619
        %v623 = vstv %s411
        %v624 = vmul.f32 %v351, %v623
        %v625 = vmul.f32 %v352, %v623
        %v626 = vmul.f32 %v353, %v623
        %v627 = vadd.f32 %v620, %v624
        %v628 = vadd.f32 %v621, %v625
        %v629 = vadd.f32 %v622, %v626
        %v630 = vstv %s363
        %v631 = vmul.f32 %v348, %v630
        %v632 = vmul.f32 %v349, %v630
        %v633 = vmul.f32 %v350, %v630
        %637 = vrot.lane.b32.xlu0 %v631, 126
        %v638 = vpop.permute.xlu0 %637
        %639 = vrot.lane.b32.xlu0 %v632, 126
        %v640 = vpop.permute.xlu0 %639
        %641 = vrot.lane.b32.xlu0 %v633, 126
        %v642 = vpop.permute.xlu0 %641
        %v646 = vadd.f32 %v616, %v638
        %v647 = vadd.f32 %v617, %v640
        %v648 = vadd.f32 %v618, %v642
        %v649 = vstv %s412
        %v650 = vmul.f32 %v351, %v649
        %v651 = vmul.f32 %v352, %v649
        %v652 = vmul.f32 %v353, %v649
        %656 = vrot.lane.b32.xlu0 %v650, 126
        %v657 = vpop.permute.xlu0 %656
        %658 = vrot.lane.b32.xlu0 %v651, 126
        %v659 = vpop.permute.xlu0 %658
        %660 = vrot.lane.b32.xlu0 %v652, 126
        %v661 = vpop.permute.xlu0 %660
        %v665 = vadd.f32 %v646, %v657
        %v666 = vadd.f32 %v647, %v659
        %v667 = vadd.f32 %v648, %v661
        %v668 = vstv %s365
        %v669 = vmul.f32 %v348, %v668
        %v670 = vmul.f32 %v349, %v668
        %v671 = vmul.f32 %v350, %v668
        %675 = vrot.lane.b32.xlu0 %v669, 124
        %v676 = vpop.permute.xlu0 %675
        %677 = vrot.lane.b32.xlu0 %v670, 124
        %v678 = vpop.permute.xlu0 %677
        %679 = vrot.lane.b32.xlu0 %v671, 124
        %v680 = vpop.permute.xlu0 %679
        %v684 = vadd.f32 %v665, %v676
        %v685 = vadd.f32 %v666, %v678
        %v686 = vadd.f32 %v667, %v680
        %v687 = vstv %s414
        %v688 = vmul.f32 %v351, %v687
        %v689 = vmul.f32 %v352, %v687
        %v690 = vmul.f32 %v353, %v687
        %694 = vrot.lane.b32.xlu0 %v688, 124
        %v695 = vpop.permute.xlu0 %694
        %696 = vrot.lane.b32.xlu0 %v689, 124
        %v697 = vpop.permute.xlu0 %696
        %698 = vrot.lane.b32.xlu0 %v690, 124
        %v699 = vpop.permute.xlu0 %698
        %v703 = vadd.f32 %v684, %v695
        %v704 = vadd.f32 %v685, %v697
        %v705 = vadd.f32 %v686, %v699
        %v706 = vstv %s367
        %v707 = vmul.f32 %v348, %v706
        %v708 = vmul.f32 %v349, %v706
        %v709 = vmul.f32 %v350, %v706
        %713 = vrot.lane.b32.xlu0 %v707, 122
        %v714 = vpop.permute.xlu0 %713
        %715 = vrot.lane.b32.xlu0 %v708, 122
        %v716 = vpop.permute.xlu0 %715
        %717 = vrot.lane.b32.xlu0 %v709, 122
        %v718 = vpop.permute.xlu0 %717
        %v722 = vadd.f32 %v703, %v714
        %v723 = vadd.f32 %v704, %v716
        %v724 = vadd.f32 %v705, %v718
        %v725 = vstv %s416
        %v726 = vmul.f32 %v351, %v725
        %v727 = vmul.f32 %v352, %v725
        %v728 = vmul.f32 %v353, %v725
        %732 = vrot.lane.b32.xlu0 %v726, 122
        %v733 = vpop.permute.xlu0 %732
        %734 = vrot.lane.b32.xlu0 %v727, 122
        %v735 = vpop.permute.xlu0 %734
        %736 = vrot.lane.b32.xlu0 %v728, 122
        %v737 = vpop.permute.xlu0 %736
        %v741 = vadd.f32 %v722, %v733
        %v742 = vadd.f32 %v723, %v735
        %v743 = vadd.f32 %v724, %v737
        %v744 = vstv %s364
        %v745 = vmul.f32 %v348, %v744
        %v746 = vmul.f32 %v349, %v744
        %v747 = vmul.f32 %v350, %v744
        %751 = vrot.lane.b32.xlu0 %v745, 126
        %v752 = vpop.permute.xlu0 %751
        %753 = vrot.lane.b32.xlu0 %v746, 126
        %v754 = vpop.permute.xlu0 %753
        %755 = vrot.lane.b32.xlu0 %v747, 126
        %v756 = vpop.permute.xlu0 %755
        %v760 = vadd.f32 %v627, %v752
        %v761 = vadd.f32 %v628, %v754
        %v762 = vadd.f32 %v629, %v756
        %v763 = vstv %s413
        %v764 = vmul.f32 %v351, %v763
        %v765 = vmul.f32 %v352, %v763
        %v766 = vmul.f32 %v353, %v763
        %770 = vrot.lane.b32.xlu0 %v764, 126
        %v771 = vpop.permute.xlu0 %770
        %772 = vrot.lane.b32.xlu0 %v765, 126
        %v773 = vpop.permute.xlu0 %772
        %774 = vrot.lane.b32.xlu0 %v766, 126
        %v775 = vpop.permute.xlu0 %774
        %v779 = vadd.f32 %v760, %v771
        %v780 = vadd.f32 %v761, %v773
        %v781 = vadd.f32 %v762, %v775
        %v782 = vstv %s366
        %v783 = vmul.f32 %v348, %v782
        %v784 = vmul.f32 %v349, %v782
        %v785 = vmul.f32 %v350, %v782
        %789 = vrot.lane.b32.xlu0 %v783, 124
        %v790 = vpop.permute.xlu0 %789
        %791 = vrot.lane.b32.xlu0 %v784, 124
        %v792 = vpop.permute.xlu0 %791
        %793 = vrot.lane.b32.xlu0 %v785, 124
        %v794 = vpop.permute.xlu0 %793
        %v798 = vadd.f32 %v779, %v790
        %v799 = vadd.f32 %v780, %v792
        %v800 = vadd.f32 %v781, %v794
        %v801 = vstv %s415
        %v802 = vmul.f32 %v351, %v801
        %v803 = vmul.f32 %v352, %v801
        %v804 = vmul.f32 %v353, %v801
        %808 = vrot.lane.b32.xlu0 %v802, 124
        %v809 = vpop.permute.xlu0 %808
        %810 = vrot.lane.b32.xlu0 %v803, 124
        %v811 = vpop.permute.xlu0 %810
        %812 = vrot.lane.b32.xlu0 %v804, 124
        %v813 = vpop.permute.xlu0 %812
        %v817 = vadd.f32 %v798, %v809
        %v818 = vadd.f32 %v799, %v811
        %v819 = vadd.f32 %v800, %v813
        %823 = vrot.lane.b32.xlu0 %v817, 127
        %v824 = vpop.permute.xlu0 %823
        %825 = vrot.lane.b32.xlu0 %v818, 127
        %v826 = vpop.permute.xlu0 %825
        %827 = vrot.lane.b32.xlu0 %v819, 127
        %v828 = vpop.permute.xlu0 %827
        %v832 = vadd.f32 %v741, %v824
        %v833 = vadd.f32 %v742, %v826
        %v834 = vadd.f32 %v743, %v828
        %v835 = vstv %s368
        %v836 = vmul.f32 %v348, %v835
        %v837 = vmul.f32 %v349, %v835
        %v838 = vmul.f32 %v350, %v835
        %v839 = vstv %s417
        %v840 = vmul.f32 %v351, %v839
        %v841 = vmul.f32 %v352, %v839
        %v842 = vmul.f32 %v353, %v839
        %v843 = vadd.f32 %v836, %v840
        %v844 = vadd.f32 %v837, %v841
        %v845 = vadd.f32 %v838, %v842
        %v846 = vstv %s369
        %v847 = vmul.f32 %v348, %v846
        %v848 = vmul.f32 %v349, %v846
        %v849 = vmul.f32 %v350, %v846
        %v850 = vstv %s418
        %v851 = vmul.f32 %v351, %v850
        %v852 = vmul.f32 %v352, %v850
        %v853 = vmul.f32 %v353, %v850
        %v854 = vadd.f32 %v847, %v851
        %v855 = vadd.f32 %v848, %v852
        %v856 = vadd.f32 %v849, %v853
        %v857 = vstv %s370
        %v858 = vmul.f32 %v348, %v857
        %v859 = vmul.f32 %v349, %v857
        %v860 = vmul.f32 %v350, %v857
        %864 = vrot.lane.b32.xlu0 %v858, 126
        %v865 = vpop.permute.xlu0 %864
        %866 = vrot.lane.b32.xlu0 %v859, 126
        %v867 = vpop.permute.xlu0 %866
        %868 = vrot.lane.b32.xlu0 %v860, 126
        %v869 = vpop.permute.xlu0 %868
        %v873 = vadd.f32 %v843, %v865
        %v874 = vadd.f32 %v844, %v867
        %v875 = vadd.f32 %v845, %v869
        %v876 = vstv %s419
        %v877 = vmul.f32 %v351, %v876
        %v878 = vmul.f32 %v352, %v876
        %v879 = vmul.f32 %v353, %v876
        %883 = vrot.lane.b32.xlu0 %v877, 126
        %v884 = vpop.permute.xlu0 %883
        %885 = vrot.lane.b32.xlu0 %v878, 126
        %v886 = vpop.permute.xlu0 %885
        %887 = vrot.lane.b32.xlu0 %v879, 126
        %v888 = vpop.permute.xlu0 %887
        %v892 = vadd.f32 %v873, %v884
        %v893 = vadd.f32 %v874, %v886
        %v894 = vadd.f32 %v875, %v888
        %v895 = vstv %s372
        %v896 = vmul.f32 %v348, %v895
        %v897 = vmul.f32 %v349, %v895
        %v898 = vmul.f32 %v350, %v895
        %902 = vrot.lane.b32.xlu0 %v896, 124
        %v903 = vpop.permute.xlu0 %902
        %904 = vrot.lane.b32.xlu0 %v897, 124
        %v905 = vpop.permute.xlu0 %904
        %906 = vrot.lane.b32.xlu0 %v898, 124
        %v907 = vpop.permute.xlu0 %906
        %v911 = vadd.f32 %v892, %v903
        %v912 = vadd.f32 %v893, %v905
        %v913 = vadd.f32 %v894, %v907
        %v914 = vstv %s421
        %v915 = vmul.f32 %v351, %v914
        %v916 = vmul.f32 %v352, %v914
        %v917 = vmul.f32 %v353, %v914
        %921 = vrot.lane.b32.xlu0 %v915, 124
        %v922 = vpop.permute.xlu0 %921
        %923 = vrot.lane.b32.xlu0 %v916, 124
        %v924 = vpop.permute.xlu0 %923
        %925 = vrot.lane.b32.xlu0 %v917, 124
        %v926 = vpop.permute.xlu0 %925
        %v930 = vadd.f32 %v911, %v922
        %v931 = vadd.f32 %v912, %v924
        %v932 = vadd.f32 %v913, %v926
        %v933 = vstv %s374
        %v934 = vmul.f32 %v348, %v933
        %v935 = vmul.f32 %v349, %v933
        %v936 = vmul.f32 %v350, %v933
        %940 = vrot.lane.b32.xlu0 %v934, 122
        %v941 = vpop.permute.xlu0 %940
        %942 = vrot.lane.b32.xlu0 %v935, 122
        %v943 = vpop.permute.xlu0 %942
        %944 = vrot.lane.b32.xlu0 %v936, 122
        %v945 = vpop.permute.xlu0 %944
        %v949 = vadd.f32 %v930, %v941
        %v950 = vadd.f32 %v931, %v943
        %v951 = vadd.f32 %v932, %v945
        %v952 = vstv %s423
        %v953 = vmul.f32 %v351, %v952
        %v954 = vmul.f32 %v352, %v952
        %v955 = vmul.f32 %v353, %v952
        %959 = vrot.lane.b32.xlu0 %v953, 122
        %v960 = vpop.permute.xlu0 %959
        %961 = vrot.lane.b32.xlu0 %v954, 122
        %v962 = vpop.permute.xlu0 %961
        %963 = vrot.lane.b32.xlu0 %v955, 122
        %v964 = vpop.permute.xlu0 %963
        %v968 = vadd.f32 %v949, %v960
        %v969 = vadd.f32 %v950, %v962
        %v970 = vadd.f32 %v951, %v964
        %v971 = vstv %s371
        %v972 = vmul.f32 %v348, %v971
        %v973 = vmul.f32 %v349, %v971
        %v974 = vmul.f32 %v350, %v971
        %978 = vrot.lane.b32.xlu0 %v972, 126
        %v979 = vpop.permute.xlu0 %978
        %980 = vrot.lane.b32.xlu0 %v973, 126
        %v981 = vpop.permute.xlu0 %980
        %982 = vrot.lane.b32.xlu0 %v974, 126
        %v983 = vpop.permute.xlu0 %982
        %v987 = vadd.f32 %v854, %v979
        %v988 = vadd.f32 %v855, %v981
        %v989 = vadd.f32 %v856, %v983
        %v990 = vstv %s420
        %v991 = vmul.f32 %v351, %v990
        %v992 = vmul.f32 %v352, %v990
        %v993 = vmul.f32 %v353, %v990
        %997 = vrot.lane.b32.xlu0 %v991, 126
        %v998 = vpop.permute.xlu0 %997
        %999 = vrot.lane.b32.xlu0 %v992, 126
        %v1000 = vpop.permute.xlu0 %999
        %1001 = vrot.lane.b32.xlu0 %v993, 126
        %v1002 = vpop.permute.xlu0 %1001
        %v1006 = vadd.f32 %v987, %v998
        %v1007 = vadd.f32 %v988, %v1000
        %v1008 = vadd.f32 %v989, %v1002
        %v1009 = vstv %s373
        %v1010 = vmul.f32 %v348, %v1009
        %v1011 = vmul.f32 %v349, %v1009
        %v1012 = vmul.f32 %v350, %v1009
        %1016 = vrot.lane.b32.xlu0 %v1010, 124
        %v1017 = vpop.permute.xlu0 %1016
        %1018 = vrot.lane.b32.xlu0 %v1011, 124
        %v1019 = vpop.permute.xlu0 %1018
        %1020 = vrot.lane.b32.xlu0 %v1012, 124
        %v1021 = vpop.permute.xlu0 %1020
        %v1025 = vadd.f32 %v1006, %v1017
        %v1026 = vadd.f32 %v1007, %v1019
        %v1027 = vadd.f32 %v1008, %v1021
        %v1028 = vstv %s422
        %v1029 = vmul.f32 %v351, %v1028
        %v1030 = vmul.f32 %v352, %v1028
        %v1031 = vmul.f32 %v353, %v1028
        %1035 = vrot.lane.b32.xlu0 %v1029, 124
        %v1036 = vpop.permute.xlu0 %1035
        %1037 = vrot.lane.b32.xlu0 %v1030, 124
        %v1038 = vpop.permute.xlu0 %1037
        %1039 = vrot.lane.b32.xlu0 %v1031, 124
        %v1040 = vpop.permute.xlu0 %1039
        %v1044 = vadd.f32 %v1025, %v1036
        %v1045 = vadd.f32 %v1026, %v1038
        %v1046 = vadd.f32 %v1027, %v1040
        %1050 = vrot.lane.b32.xlu0 %v1044, 127
        %v1051 = vpop.permute.xlu0 %1050
        %1052 = vrot.lane.b32.xlu0 %v1045, 127
        %v1053 = vpop.permute.xlu0 %1052
        %1054 = vrot.lane.b32.xlu0 %v1046, 127
        %v1055 = vpop.permute.xlu0 %1054
        %v1059 = vadd.f32 %v968, %v1051
        %v1060 = vadd.f32 %v969, %v1053
        %v1061 = vadd.f32 %v970, %v1055
        %v1062 = vstv %s375
        %v1063 = vmul.f32 %v348, %v1062
        %v1064 = vmul.f32 %v349, %v1062
        %v1065 = vmul.f32 %v350, %v1062
        %v1066 = vstv %s424
        %v1067 = vmul.f32 %v351, %v1066
        %v1068 = vmul.f32 %v352, %v1066
        %v1069 = vmul.f32 %v353, %v1066
        %v1070 = vadd.f32 %v1063, %v1067
        %v1071 = vadd.f32 %v1064, %v1068
        %v1072 = vadd.f32 %v1065, %v1069
        %v1073 = vstv %s376
        %v1074 = vmul.f32 %v348, %v1073
        %v1075 = vmul.f32 %v349, %v1073
        %v1076 = vmul.f32 %v350, %v1073
        %v1077 = vstv %s425
        %v1078 = vmul.f32 %v351, %v1077
        %v1079 = vmul.f32 %v352, %v1077
        %v1080 = vmul.f32 %v353, %v1077
        %v1081 = vadd.f32 %v1074, %v1078
        %v1082 = vadd.f32 %v1075, %v1079
        %v1083 = vadd.f32 %v1076, %v1080
        %v1084 = vstv %s377
        %v1085 = vmul.f32 %v348, %v1084
        %v1086 = vmul.f32 %v349, %v1084
        %v1087 = vmul.f32 %v350, %v1084
        %1091 = vrot.lane.b32.xlu0 %v1085, 126
        %v1092 = vpop.permute.xlu0 %1091
        %1093 = vrot.lane.b32.xlu0 %v1086, 126
        %v1094 = vpop.permute.xlu0 %1093
        %1095 = vrot.lane.b32.xlu0 %v1087, 126
        %v1096 = vpop.permute.xlu0 %1095
        %v1100 = vadd.f32 %v1070, %v1092
        %v1101 = vadd.f32 %v1071, %v1094
        %v1102 = vadd.f32 %v1072, %v1096
        %v1103 = vstv %s426
        %v1104 = vmul.f32 %v351, %v1103
        %v1105 = vmul.f32 %v352, %v1103
        %v1106 = vmul.f32 %v353, %v1103
        %1110 = vrot.lane.b32.xlu0 %v1104, 126
        %v1111 = vpop.permute.xlu0 %1110
        %1112 = vrot.lane.b32.xlu0 %v1105, 126
        %v1113 = vpop.permute.xlu0 %1112
        %1114 = vrot.lane.b32.xlu0 %v1106, 126
        %v1115 = vpop.permute.xlu0 %1114
        %v1119 = vadd.f32 %v1100, %v1111
        %v1120 = vadd.f32 %v1101, %v1113
        %v1121 = vadd.f32 %v1102, %v1115
        %v1122 = vstv %s379
        %v1123 = vmul.f32 %v348, %v1122
        %v1124 = vmul.f32 %v349, %v1122
        %v1125 = vmul.f32 %v350, %v1122
        %1129 = vrot.lane.b32.xlu0 %v1123, 124
        %v1130 = vpop.permute.xlu0 %1129
        %1131 = vrot.lane.b32.xlu0 %v1124, 124
        %v1132 = vpop.permute.xlu0 %1131
        %1133 = vrot.lane.b32.xlu0 %v1125, 124
        %v1134 = vpop.permute.xlu0 %1133
        %v1138 = vadd.f32 %v1119, %v1130
        %v1139 = vadd.f32 %v1120, %v1132
        %v1140 = vadd.f32 %v1121, %v1134
        %v1141 = vstv %s428
        %v1142 = vmul.f32 %v351, %v1141
        %v1143 = vmul.f32 %v352, %v1141
        %v1144 = vmul.f32 %v353, %v1141
        %1148 = vrot.lane.b32.xlu0 %v1142, 124
        %v1149 = vpop.permute.xlu0 %1148
        %1150 = vrot.lane.b32.xlu0 %v1143, 124
        %v1151 = vpop.permute.xlu0 %1150
        %1152 = vrot.lane.b32.xlu0 %v1144, 124
        %v1153 = vpop.permute.xlu0 %1152
        %v1157 = vadd.f32 %v1138, %v1149
        %v1158 = vadd.f32 %v1139, %v1151
        %v1159 = vadd.f32 %v1140, %v1153
        %v1160 = vstv %s381
        %v1161 = vmul.f32 %v348, %v1160
        %v1162 = vmul.f32 %v349, %v1160
        %v1163 = vmul.f32 %v350, %v1160
        %1167 = vrot.lane.b32.xlu0 %v1161, 122
        %v1168 = vpop.permute.xlu0 %1167
        %1169 = vrot.lane.b32.xlu0 %v1162, 122
        %v1170 = vpop.permute.xlu0 %1169
        %1171 = vrot.lane.b32.xlu0 %v1163, 122
        %v1172 = vpop.permute.xlu0 %1171
        %v1176 = vadd.f32 %v1157, %v1168
        %v1177 = vadd.f32 %v1158, %v1170
        %v1178 = vadd.f32 %v1159, %v1172
        %v1179 = vstv %s430
        %v1180 = vmul.f32 %v351, %v1179
        %v1181 = vmul.f32 %v352, %v1179
        %v1182 = vmul.f32 %v353, %v1179
        %1186 = vrot.lane.b32.xlu0 %v1180, 122
        %v1187 = vpop.permute.xlu0 %1186
        %1188 = vrot.lane.b32.xlu0 %v1181, 122
        %v1189 = vpop.permute.xlu0 %1188
        %1190 = vrot.lane.b32.xlu0 %v1182, 122
        %v1191 = vpop.permute.xlu0 %1190
        %v1195 = vadd.f32 %v1176, %v1187
        %v1196 = vadd.f32 %v1177, %v1189
        %v1197 = vadd.f32 %v1178, %v1191
        %v1198 = vstv %s378
        %v1199 = vmul.f32 %v348, %v1198
        %v1200 = vmul.f32 %v349, %v1198
        %v1201 = vmul.f32 %v350, %v1198
        %1205 = vrot.lane.b32.xlu0 %v1199, 126
        %v1206 = vpop.permute.xlu0 %1205
        %1207 = vrot.lane.b32.xlu0 %v1200, 126
        %v1208 = vpop.permute.xlu0 %1207
        %1209 = vrot.lane.b32.xlu0 %v1201, 126
        %v1210 = vpop.permute.xlu0 %1209
        %v1214 = vadd.f32 %v1081, %v1206
        %v1215 = vadd.f32 %v1082, %v1208
        %v1216 = vadd.f32 %v1083, %v1210
        %v1217 = vstv %s427
        %v1218 = vmul.f32 %v351, %v1217
        %v1219 = vmul.f32 %v352, %v1217
        %v1220 = vmul.f32 %v353, %v1217
        %1224 = vrot.lane.b32.xlu0 %v1218, 126
        %v1225 = vpop.permute.xlu0 %1224
        %1226 = vrot.lane.b32.xlu0 %v1219, 126
        %v1227 = vpop.permute.xlu0 %1226
        %1228 = vrot.lane.b32.xlu0 %v1220, 126
        %v1229 = vpop.permute.xlu0 %1228
        %v1233 = vadd.f32 %v1214, %v1225
        %v1234 = vadd.f32 %v1215, %v1227
        %v1235 = vadd.f32 %v1216, %v1229
        %v1236 = vstv %s380
        %v1237 = vmul.f32 %v348, %v1236
        %v1238 = vmul.f32 %v349, %v1236
        %v1239 = vmul.f32 %v350, %v1236
        %1243 = vrot.lane.b32.xlu0 %v1237, 124
        %v1244 = vpop.permute.xlu0 %1243
        %1245 = vrot.lane.b32.xlu0 %v1238, 124
        %v1246 = vpop.permute.xlu0 %1245
        %1247 = vrot.lane.b32.xlu0 %v1239, 124
        %v1248 = vpop.permute.xlu0 %1247
        %v1252 = vadd.f32 %v1233, %v1244
        %v1253 = vadd.f32 %v1234, %v1246
        %v1254 = vadd.f32 %v1235, %v1248
        %v1255 = vstv %s429
        %v1256 = vmul.f32 %v351, %v1255
        %v1257 = vmul.f32 %v352, %v1255
        %v1258 = vmul.f32 %v353, %v1255
        %1262 = vrot.lane.b32.xlu0 %v1256, 124
        %v1263 = vpop.permute.xlu0 %1262
        %1264 = vrot.lane.b32.xlu0 %v1257, 124
        %v1265 = vpop.permute.xlu0 %1264
        %1266 = vrot.lane.b32.xlu0 %v1258, 124
        %v1267 = vpop.permute.xlu0 %1266
        %v1271 = vadd.f32 %v1252, %v1263
        %v1272 = vadd.f32 %v1253, %v1265
        %v1273 = vadd.f32 %v1254, %v1267
        %1277 = vrot.lane.b32.xlu0 %v1271, 127
        %v1278 = vpop.permute.xlu0 %1277
        %1279 = vrot.lane.b32.xlu0 %v1272, 127
        %v1280 = vpop.permute.xlu0 %1279
        %1281 = vrot.lane.b32.xlu0 %v1273, 127
        %v1282 = vpop.permute.xlu0 %1281
        %v1286 = vadd.f32 %v1195, %v1278
        %v1287 = vadd.f32 %v1196, %v1280
        %v1288 = vadd.f32 %v1197, %v1282
        %v1289 = vstv %s382
        %v1290 = vmul.f32 %v348, %v1289
        %v1291 = vmul.f32 %v349, %v1289
        %v1292 = vmul.f32 %v350, %v1289
        %v1293 = vstv %s431
        %v1294 = vmul.f32 %v351, %v1293
        %v1295 = vmul.f32 %v352, %v1293
        %v1296 = vmul.f32 %v353, %v1293
        %v1297 = vadd.f32 %v1290, %v1294
        %v1298 = vadd.f32 %v1291, %v1295
        %v1299 = vadd.f32 %v1292, %v1296
        %v1300 = vstv %s383
        %v1301 = vmul.f32 %v348, %v1300
        %v1302 = vmul.f32 %v349, %v1300
        %v1303 = vmul.f32 %v350, %v1300
        %v1304 = vstv %s432
        %v1305 = vmul.f32 %v351, %v1304
        %v1306 = vmul.f32 %v352, %v1304
        %v1307 = vmul.f32 %v353, %v1304
        %v1308 = vadd.f32 %v1301, %v1305
        %v1309 = vadd.f32 %v1302, %v1306
        %v1310 = vadd.f32 %v1303, %v1307
        %v1311 = vstv %s384
        %v1312 = vmul.f32 %v348, %v1311
        %v1313 = vmul.f32 %v349, %v1311
        %v1314 = vmul.f32 %v350, %v1311
        %1318 = vrot.lane.b32.xlu0 %v1312, 126
        %v1319 = vpop.permute.xlu0 %1318
        %1320 = vrot.lane.b32.xlu0 %v1313, 126
        %v1321 = vpop.permute.xlu0 %1320
        %1322 = vrot.lane.b32.xlu0 %v1314, 126
        %v1323 = vpop.permute.xlu0 %1322
        %v1327 = vadd.f32 %v1297, %v1319
        %v1328 = vadd.f32 %v1298, %v1321
        %v1329 = vadd.f32 %v1299, %v1323
        %v1330 = vstv %s433
        %v1331 = vmul.f32 %v351, %v1330
        %v1332 = vmul.f32 %v352, %v1330
        %v1333 = vmul.f32 %v353, %v1330
        %1337 = vrot.lane.b32.xlu0 %v1331, 126
        %v1338 = vpop.permute.xlu0 %1337
        %1339 = vrot.lane.b32.xlu0 %v1332, 126
        %v1340 = vpop.permute.xlu0 %1339
        %1341 = vrot.lane.b32.xlu0 %v1333, 126
        %v1342 = vpop.permute.xlu0 %1341
        %v1346 = vadd.f32 %v1327, %v1338
        %v1347 = vadd.f32 %v1328, %v1340
        %v1348 = vadd.f32 %v1329, %v1342
        %v1349 = vstv %s386
        %v1350 = vmul.f32 %v348, %v1349
        %v1351 = vmul.f32 %v349, %v1349
        %v1352 = vmul.f32 %v350, %v1349
        %1356 = vrot.lane.b32.xlu0 %v1350, 124
        %v1357 = vpop.permute.xlu0 %1356
        %1358 = vrot.lane.b32.xlu0 %v1351, 124
        %v1359 = vpop.permute.xlu0 %1358
        %1360 = vrot.lane.b32.xlu0 %v1352, 124
        %v1361 = vpop.permute.xlu0 %1360
        %v1365 = vadd.f32 %v1346, %v1357
        %v1366 = vadd.f32 %v1347, %v1359
        %v1367 = vadd.f32 %v1348, %v1361
        %v1368 = vstv %s435
        %v1369 = vmul.f32 %v351, %v1368
        %v1370 = vmul.f32 %v352, %v1368
        %v1371 = vmul.f32 %v353, %v1368
        %1375 = vrot.lane.b32.xlu0 %v1369, 124
        %v1376 = vpop.permute.xlu0 %1375
        %1377 = vrot.lane.b32.xlu0 %v1370, 124
        %v1378 = vpop.permute.xlu0 %1377
        %1379 = vrot.lane.b32.xlu0 %v1371, 124
        %v1380 = vpop.permute.xlu0 %1379
        %v1384 = vadd.f32 %v1365, %v1376
        %v1385 = vadd.f32 %v1366, %v1378
        %v1386 = vadd.f32 %v1367, %v1380
        %v1387 = vstv %s388
        %v1388 = vmul.f32 %v348, %v1387
        %v1389 = vmul.f32 %v349, %v1387
        %v1390 = vmul.f32 %v350, %v1387
        %1394 = vrot.lane.b32.xlu0 %v1388, 122
        %v1395 = vpop.permute.xlu0 %1394
        %1396 = vrot.lane.b32.xlu0 %v1389, 122
        %v1397 = vpop.permute.xlu0 %1396
        %1398 = vrot.lane.b32.xlu0 %v1390, 122
        %v1399 = vpop.permute.xlu0 %1398
        %v1403 = vadd.f32 %v1384, %v1395
        %v1404 = vadd.f32 %v1385, %v1397
        %v1405 = vadd.f32 %v1386, %v1399
        %v1406 = vstv %s437
        %v1407 = vmul.f32 %v351, %v1406
        %v1408 = vmul.f32 %v352, %v1406
        %v1409 = vmul.f32 %v353, %v1406
        %1413 = vrot.lane.b32.xlu0 %v1407, 122
        %v1414 = vpop.permute.xlu0 %1413
        %1415 = vrot.lane.b32.xlu0 %v1408, 122
        %v1416 = vpop.permute.xlu0 %1415
        %1417 = vrot.lane.b32.xlu0 %v1409, 122
        %v1418 = vpop.permute.xlu0 %1417
        %v1422 = vadd.f32 %v1403, %v1414
        %v1423 = vadd.f32 %v1404, %v1416
        %v1424 = vadd.f32 %v1405, %v1418
        %v1425 = vstv %s385
        %v1426 = vmul.f32 %v348, %v1425
        %v1427 = vmul.f32 %v349, %v1425
        %v1428 = vmul.f32 %v350, %v1425
        %1432 = vrot.lane.b32.xlu0 %v1426, 126
        %v1433 = vpop.permute.xlu0 %1432
        %1434 = vrot.lane.b32.xlu0 %v1427, 126
        %v1435 = vpop.permute.xlu0 %1434
        %1436 = vrot.lane.b32.xlu0 %v1428, 126
        %v1437 = vpop.permute.xlu0 %1436
        %v1441 = vadd.f32 %v1308, %v1433
        %v1442 = vadd.f32 %v1309, %v1435
        %v1443 = vadd.f32 %v1310, %v1437
        %v1444 = vstv %s434
        %v1445 = vmul.f32 %v351, %v1444
        %v1446 = vmul.f32 %v352, %v1444
        %v1447 = vmul.f32 %v353, %v1444
        %1451 = vrot.lane.b32.xlu0 %v1445, 126
        %v1452 = vpop.permute.xlu0 %1451
        %1453 = vrot.lane.b32.xlu0 %v1446, 126
        %v1454 = vpop.permute.xlu0 %1453
        %1455 = vrot.lane.b32.xlu0 %v1447, 126
        %v1456 = vpop.permute.xlu0 %1455
        %v1460 = vadd.f32 %v1441, %v1452
        %v1461 = vadd.f32 %v1442, %v1454
        %v1462 = vadd.f32 %v1443, %v1456
        %v1463 = vstv %s387
        %v1464 = vmul.f32 %v348, %v1463
        %v1465 = vmul.f32 %v349, %v1463
        %v1466 = vmul.f32 %v350, %v1463
        %1470 = vrot.lane.b32.xlu0 %v1464, 124
        %v1471 = vpop.permute.xlu0 %1470
        %1472 = vrot.lane.b32.xlu0 %v1465, 124
        %v1473 = vpop.permute.xlu0 %1472
        %1474 = vrot.lane.b32.xlu0 %v1466, 124
        %v1475 = vpop.permute.xlu0 %1474
        %v1479 = vadd.f32 %v1460, %v1471
        %v1480 = vadd.f32 %v1461, %v1473
        %v1481 = vadd.f32 %v1462, %v1475
        %v1482 = vstv %s436
        %v1483 = vmul.f32 %v351, %v1482
        %v1484 = vmul.f32 %v352, %v1482
        %v1485 = vmul.f32 %v353, %v1482
        %1489 = vrot.lane.b32.xlu0 %v1483, 124
        %v1490 = vpop.permute.xlu0 %1489
        %1491 = vrot.lane.b32.xlu0 %v1484, 124
        %v1492 = vpop.permute.xlu0 %1491
        %1493 = vrot.lane.b32.xlu0 %v1485, 124
        %v1494 = vpop.permute.xlu0 %1493
        %v1498 = vadd.f32 %v1479, %v1490
        %v1499 = vadd.f32 %v1480, %v1492
        %v1500 = vadd.f32 %v1481, %v1494
        %1504 = vrot.lane.b32.xlu0 %v1498, 127
        %v1505 = vpop.permute.xlu0 %1504
        %1506 = vrot.lane.b32.xlu0 %v1499, 127
        %v1507 = vpop.permute.xlu0 %1506
        %1508 = vrot.lane.b32.xlu0 %v1500, 127
        %v1509 = vpop.permute.xlu0 %1508
        %v1513 = vadd.f32 %v1422, %v1505
        %v1514 = vadd.f32 %v1423, %v1507
        %v1515 = vadd.f32 %v1424, %v1509
        %v1516 = vstv %s389
        %v1517 = vmul.f32 %v348, %v1516
        %v1518 = vmul.f32 %v349, %v1516
        %v1519 = vmul.f32 %v350, %v1516
        %v1520 = vstv %s438
        %v1521 = vmul.f32 %v351, %v1520
        %v1522 = vmul.f32 %v352, %v1520
        %v1523 = vmul.f32 %v353, %v1520
        %v1524 = vadd.f32 %v1517, %v1521
        %v1525 = vadd.f32 %v1518, %v1522
        %v1526 = vadd.f32 %v1519, %v1523
        %v1527 = vstv %s390
        %v1528 = vmul.f32 %v348, %v1527
        %v1529 = vmul.f32 %v349, %v1527
        %v1530 = vmul.f32 %v350, %v1527
        %v1531 = vstv %s439
        %v1532 = vmul.f32 %v351, %v1531
        %v1533 = vmul.f32 %v352, %v1531
        %v1534 = vmul.f32 %v353, %v1531
        %v1535 = vadd.f32 %v1528, %v1532
        %v1536 = vadd.f32 %v1529, %v1533
        %v1537 = vadd.f32 %v1530, %v1534
        %v1538 = vstv %s391
        %v1539 = vmul.f32 %v348, %v1538
        %v1540 = vmul.f32 %v349, %v1538
        %v1541 = vmul.f32 %v350, %v1538
        %1545 = vrot.lane.b32.xlu0 %v1539, 126
        %v1546 = vpop.permute.xlu0 %1545
        %1547 = vrot.lane.b32.xlu0 %v1540, 126
        %v1548 = vpop.permute.xlu0 %1547
        %1549 = vrot.lane.b32.xlu0 %v1541, 126
        %v1550 = vpop.permute.xlu0 %1549
        %v1554 = vadd.f32 %v1524, %v1546
        %v1555 = vadd.f32 %v1525, %v1548
        %v1556 = vadd.f32 %v1526, %v1550
        %v1557 = vstv %s440
        %v1558 = vmul.f32 %v351, %v1557
        %v1559 = vmul.f32 %v352, %v1557
        %v1560 = vmul.f32 %v353, %v1557
        %1564 = vrot.lane.b32.xlu0 %v1558, 126
        %v1565 = vpop.permute.xlu0 %1564
        %1566 = vrot.lane.b32.xlu0 %v1559, 126
        %v1567 = vpop.permute.xlu0 %1566
        %1568 = vrot.lane.b32.xlu0 %v1560, 126
        %v1569 = vpop.permute.xlu0 %1568
        %v1573 = vadd.f32 %v1554, %v1565
        %v1574 = vadd.f32 %v1555, %v1567
        %v1575 = vadd.f32 %v1556, %v1569
        %v1576 = vstv %s393
        %v1577 = vmul.f32 %v348, %v1576
        %v1578 = vmul.f32 %v349, %v1576
        %v1579 = vmul.f32 %v350, %v1576
        %1583 = vrot.lane.b32.xlu0 %v1577, 124
        %v1584 = vpop.permute.xlu0 %1583
        %1585 = vrot.lane.b32.xlu0 %v1578, 124
        %v1586 = vpop.permute.xlu0 %1585
        %1587 = vrot.lane.b32.xlu0 %v1579, 124
        %v1588 = vpop.permute.xlu0 %1587
        %v1592 = vadd.f32 %v1573, %v1584
        %v1593 = vadd.f32 %v1574, %v1586
        %v1594 = vadd.f32 %v1575, %v1588
        %v1595 = vstv %s442
        %v1596 = vmul.f32 %v351, %v1595
        %v1597 = vmul.f32 %v352, %v1595
        %v1598 = vmul.f32 %v353, %v1595
        %1602 = vrot.lane.b32.xlu0 %v1596, 124
        %v1603 = vpop.permute.xlu0 %1602
        %1604 = vrot.lane.b32.xlu0 %v1597, 124
        %v1605 = vpop.permute.xlu0 %1604
        %1606 = vrot.lane.b32.xlu0 %v1598, 124
        %v1607 = vpop.permute.xlu0 %1606
        %v1611 = vadd.f32 %v1592, %v1603
        %v1612 = vadd.f32 %v1593, %v1605
        %v1613 = vadd.f32 %v1594, %v1607
        %v1614 = vstv %s395
        %v1615 = vmul.f32 %v348, %v1614
        %v1616 = vmul.f32 %v349, %v1614
        %v1617 = vmul.f32 %v350, %v1614
        %1621 = vrot.lane.b32.xlu0 %v1615, 122
        %v1622 = vpop.permute.xlu0 %1621
        %1623 = vrot.lane.b32.xlu0 %v1616, 122
        %v1624 = vpop.permute.xlu0 %1623
        %1625 = vrot.lane.b32.xlu0 %v1617, 122
        %v1626 = vpop.permute.xlu0 %1625
        %v1630 = vadd.f32 %v1611, %v1622
        %v1631 = vadd.f32 %v1612, %v1624
        %v1632 = vadd.f32 %v1613, %v1626
        %v1633 = vstv %s444
        %v1634 = vmul.f32 %v351, %v1633
        %v1635 = vmul.f32 %v352, %v1633
        %v1636 = vmul.f32 %v353, %v1633
        %1640 = vrot.lane.b32.xlu0 %v1634, 122
        %v1641 = vpop.permute.xlu0 %1640
        %1642 = vrot.lane.b32.xlu0 %v1635, 122
        %v1643 = vpop.permute.xlu0 %1642
        %1644 = vrot.lane.b32.xlu0 %v1636, 122
        %v1645 = vpop.permute.xlu0 %1644
        %v1649 = vadd.f32 %v1630, %v1641
        %v1650 = vadd.f32 %v1631, %v1643
        %v1651 = vadd.f32 %v1632, %v1645
        %v1652 = vstv %s392
        %v1653 = vmul.f32 %v348, %v1652
        %v1654 = vmul.f32 %v349, %v1652
        %v1655 = vmul.f32 %v350, %v1652
        %1659 = vrot.lane.b32.xlu0 %v1653, 126
        %v1660 = vpop.permute.xlu0 %1659
        %1661 = vrot.lane.b32.xlu0 %v1654, 126
        %v1662 = vpop.permute.xlu0 %1661
        %1663 = vrot.lane.b32.xlu0 %v1655, 126
        %v1664 = vpop.permute.xlu0 %1663
        %v1668 = vadd.f32 %v1535, %v1660
        %v1669 = vadd.f32 %v1536, %v1662
        %v1670 = vadd.f32 %v1537, %v1664
        %v1671 = vstv %s441
        %v1672 = vmul.f32 %v351, %v1671
        %v1673 = vmul.f32 %v352, %v1671
        %v1674 = vmul.f32 %v353, %v1671
        %1678 = vrot.lane.b32.xlu0 %v1672, 126
        %v1679 = vpop.permute.xlu0 %1678
        %1680 = vrot.lane.b32.xlu0 %v1673, 126
        %v1681 = vpop.permute.xlu0 %1680
        %1682 = vrot.lane.b32.xlu0 %v1674, 126
        %v1683 = vpop.permute.xlu0 %1682
        %v1687 = vadd.f32 %v1668, %v1679
        %v1688 = vadd.f32 %v1669, %v1681
        %v1689 = vadd.f32 %v1670, %v1683
        %v1690 = vstv %s394
        %v1691 = vmul.f32 %v348, %v1690
        %v1692 = vmul.f32 %v349, %v1690
        %v1693 = vmul.f32 %v350, %v1690
        %1697 = vrot.lane.b32.xlu0 %v1691, 124
        %v1698 = vpop.permute.xlu0 %1697
        %1699 = vrot.lane.b32.xlu0 %v1692, 124
        %v1700 = vpop.permute.xlu0 %1699
        %1701 = vrot.lane.b32.xlu0 %v1693, 124
        %v1702 = vpop.permute.xlu0 %1701
        %v1706 = vadd.f32 %v1687, %v1698
        %v1707 = vadd.f32 %v1688, %v1700
        %v1708 = vadd.f32 %v1689, %v1702
        %v1709 = vstv %s443
        %v1710 = vmul.f32 %v351, %v1709
        %v1711 = vmul.f32 %v352, %v1709
        %v1712 = vmul.f32 %v353, %v1709
        %1716 = vrot.lane.b32.xlu0 %v1710, 124
        %v1717 = vpop.permute.xlu0 %1716
        %1718 = vrot.lane.b32.xlu0 %v1711, 124
        %v1719 = vpop.permute.xlu0 %1718
        %1720 = vrot.lane.b32.xlu0 %v1712, 124
        %v1721 = vpop.permute.xlu0 %1720
        %v1725 = vadd.f32 %v1706, %v1717
        %v1726 = vadd.f32 %v1707, %v1719
        %v1727 = vadd.f32 %v1708, %v1721
        %1731 = vrot.lane.b32.xlu0 %v1725, 127
        %v1732 = vpop.permute.xlu0 %1731
        %1733 = vrot.lane.b32.xlu0 %v1726, 127
        %v1734 = vpop.permute.xlu0 %1733
        %1735 = vrot.lane.b32.xlu0 %v1727, 127
        %v1736 = vpop.permute.xlu0 %1735
        %v1740 = vadd.f32 %v1649, %v1732
        %v1741 = vadd.f32 %v1650, %v1734
        %v1742 = vadd.f32 %v1651, %v1736
        %v1743 = vstv %s396
        %v1744 = vmul.f32 %v348, %v1743
        %v1745 = vmul.f32 %v349, %v1743
        %v1746 = vmul.f32 %v350, %v1743
        %v1747 = vstv %s445
        %v1748 = vmul.f32 %v351, %v1747
        %v1749 = vmul.f32 %v352, %v1747
        %v1750 = vmul.f32 %v353, %v1747
        %v1751 = vadd.f32 %v1744, %v1748
        %v1752 = vadd.f32 %v1745, %v1749
        %v1753 = vadd.f32 %v1746, %v1750
        %v1754 = vstv %s397
        %v1755 = vmul.f32 %v348, %v1754
        %v1756 = vmul.f32 %v349, %v1754
        %v1757 = vmul.f32 %v350, %v1754
        %v1758 = vstv %s446
        %v1759 = vmul.f32 %v351, %v1758
        %v1760 = vmul.f32 %v352, %v1758
        %v1761 = vmul.f32 %v353, %v1758
        %v1762 = vadd.f32 %v1755, %v1759
        %v1763 = vadd.f32 %v1756, %v1760
        %v1764 = vadd.f32 %v1757, %v1761
        %v1765 = vstv %s398
        %v1766 = vmul.f32 %v348, %v1765
        %v1767 = vmul.f32 %v349, %v1765
        %v1768 = vmul.f32 %v350, %v1765
        %1772 = vrot.lane.b32.xlu0 %v1766, 126
        %v1773 = vpop.permute.xlu0 %1772
        %1774 = vrot.lane.b32.xlu0 %v1767, 126
        %v1775 = vpop.permute.xlu0 %1774
        %1776 = vrot.lane.b32.xlu0 %v1768, 126
        %v1777 = vpop.permute.xlu0 %1776
        %v1781 = vadd.f32 %v1751, %v1773
        %v1782 = vadd.f32 %v1752, %v1775
        %v1783 = vadd.f32 %v1753, %v1777
        %v1784 = vstv %s447
        %v1785 = vmul.f32 %v351, %v1784
        %v1786 = vmul.f32 %v352, %v1784
        %v1787 = vmul.f32 %v353, %v1784
        %1791 = vrot.lane.b32.xlu0 %v1785, 126
        %v1792 = vpop.permute.xlu0 %1791
        %1793 = vrot.lane.b32.xlu0 %v1786, 126
        %v1794 = vpop.permute.xlu0 %1793
        %1795 = vrot.lane.b32.xlu0 %v1787, 126
        %v1796 = vpop.permute.xlu0 %1795
        %v1800 = vadd.f32 %v1781, %v1792
        %v1801 = vadd.f32 %v1782, %v1794
        %v1802 = vadd.f32 %v1783, %v1796
        %v1803 = vstv %s400
        %v1804 = vmul.f32 %v348, %v1803
        %v1805 = vmul.f32 %v349, %v1803
        %v1806 = vmul.f32 %v350, %v1803
        %1810 = vrot.lane.b32.xlu0 %v1804, 124
        %v1811 = vpop.permute.xlu0 %1810
        %1812 = vrot.lane.b32.xlu0 %v1805, 124
        %v1813 = vpop.permute.xlu0 %1812
        %1814 = vrot.lane.b32.xlu0 %v1806, 124
        %v1815 = vpop.permute.xlu0 %1814
        %v1819 = vadd.f32 %v1800, %v1811
        %v1820 = vadd.f32 %v1801, %v1813
        %v1821 = vadd.f32 %v1802, %v1815
        %v1822 = vstv %s449
        %v1823 = vmul.f32 %v351, %v1822
        %v1824 = vmul.f32 %v352, %v1822
        %v1825 = vmul.f32 %v353, %v1822
        %1829 = vrot.lane.b32.xlu0 %v1823, 124
        %v1830 = vpop.permute.xlu0 %1829
        %1831 = vrot.lane.b32.xlu0 %v1824, 124
        %v1832 = vpop.permute.xlu0 %1831
        %1833 = vrot.lane.b32.xlu0 %v1825, 124
        %v1834 = vpop.permute.xlu0 %1833
        %v1838 = vadd.f32 %v1819, %v1830
        %v1839 = vadd.f32 %v1820, %v1832
        %v1840 = vadd.f32 %v1821, %v1834
        %v1841 = vstv %s402
        %v1842 = vmul.f32 %v348, %v1841
        %v1843 = vmul.f32 %v349, %v1841
        %v1844 = vmul.f32 %v350, %v1841
        %1848 = vrot.lane.b32.xlu0 %v1842, 122
        %v1849 = vpop.permute.xlu0 %1848
        %1850 = vrot.lane.b32.xlu0 %v1843, 122
        %v1851 = vpop.permute.xlu0 %1850
        %1852 = vrot.lane.b32.xlu0 %v1844, 122
        %v1853 = vpop.permute.xlu0 %1852
        %v1857 = vadd.f32 %v1838, %v1849
        %v1858 = vadd.f32 %v1839, %v1851
        %v1859 = vadd.f32 %v1840, %v1853
        %v1860 = vstv %s451
        %v1861 = vmul.f32 %v351, %v1860
        %v1862 = vmul.f32 %v352, %v1860
        %v1863 = vmul.f32 %v353, %v1860
        %1867 = vrot.lane.b32.xlu0 %v1861, 122
        %v1868 = vpop.permute.xlu0 %1867
        %1869 = vrot.lane.b32.xlu0 %v1862, 122
        %v1870 = vpop.permute.xlu0 %1869
        %1871 = vrot.lane.b32.xlu0 %v1863, 122
        %v1872 = vpop.permute.xlu0 %1871
        %v1876 = vadd.f32 %v1857, %v1868
        %v1877 = vadd.f32 %v1858, %v1870
        %v1878 = vadd.f32 %v1859, %v1872
        %v1879 = vstv %s399
        %v1880 = vmul.f32 %v348, %v1879
        %v1881 = vmul.f32 %v349, %v1879
        %v1882 = vmul.f32 %v350, %v1879
        %1886 = vrot.lane.b32.xlu0 %v1880, 126
        %v1887 = vpop.permute.xlu0 %1886
        %1888 = vrot.lane.b32.xlu0 %v1881, 126
        %v1889 = vpop.permute.xlu0 %1888
        %1890 = vrot.lane.b32.xlu0 %v1882, 126
        %v1891 = vpop.permute.xlu0 %1890
        %v1895 = vadd.f32 %v1762, %v1887
        %v1896 = vadd.f32 %v1763, %v1889
        %v1897 = vadd.f32 %v1764, %v1891
        %v1898 = vstv %s448
        %v1899 = vmul.f32 %v351, %v1898
        %v1900 = vmul.f32 %v352, %v1898
        %v1901 = vmul.f32 %v353, %v1898
        %1905 = vrot.lane.b32.xlu0 %v1899, 126
        %v1906 = vpop.permute.xlu0 %1905
        %1907 = vrot.lane.b32.xlu0 %v1900, 126
        %v1908 = vpop.permute.xlu0 %1907
        %1909 = vrot.lane.b32.xlu0 %v1901, 126
        %v1910 = vpop.permute.xlu0 %1909
        %v1914 = vadd.f32 %v1895, %v1906
        %v1915 = vadd.f32 %v1896, %v1908
        %v1916 = vadd.f32 %v1897, %v1910
        %v1917 = vstv %s401
        %v1918 = vmul.f32 %v348, %v1917
        %v1919 = vmul.f32 %v349, %v1917
        %v1920 = vmul.f32 %v350, %v1917
        %1924 = vrot.lane.b32.xlu0 %v1918, 124
        %v1925 = vpop.permute.xlu0 %1924
        %1926 = vrot.lane.b32.xlu0 %v1919, 124
        %v1927 = vpop.permute.xlu0 %1926
        %1928 = vrot.lane.b32.xlu0 %v1920, 124
        %v1929 = vpop.permute.xlu0 %1928
        %v1933 = vadd.f32 %v1914, %v1925
        %v1934 = vadd.f32 %v1915, %v1927
        %v1935 = vadd.f32 %v1916, %v1929
        %v1936 = vstv %s450
        %v1937 = vmul.f32 %v351, %v1936
        %v1938 = vmul.f32 %v352, %v1936
        %v1939 = vmul.f32 %v353, %v1936
        %1943 = vrot.lane.b32.xlu0 %v1937, 124
        %v1944 = vpop.permute.xlu0 %1943
        %1945 = vrot.lane.b32.xlu0 %v1938, 124
        %v1946 = vpop.permute.xlu0 %1945
        %1947 = vrot.lane.b32.xlu0 %v1939, 124
        %v1948 = vpop.permute.xlu0 %1947
        %v1952 = vadd.f32 %v1933, %v1944
        %v1953 = vadd.f32 %v1934, %v1946
        %v1954 = vadd.f32 %v1935, %v1948
        %1958 = vrot.lane.b32.xlu0 %v1952, 127
        %v1959 = vpop.permute.xlu0 %1958
        %1960 = vrot.lane.b32.xlu0 %v1953, 127
        %v1961 = vpop.permute.xlu0 %1960
        %1962 = vrot.lane.b32.xlu0 %v1954, 127
        %v1963 = vpop.permute.xlu0 %1962
        %v1967 = vadd.f32 %v1876, %v1959
        %v1968 = vadd.f32 %v1877, %v1961
        %v1969 = vadd.f32 %v1878, %v1963
        %vm1973 = vcmask 1046528
        %v1974 = vrot.slane %v832, 1
        %v1975 = vrot.slane %v833, 1
        %v1976 = vsel %vm1973, %v1974, %v1975
        %v1977 = vrot.slane %v834, 1
        %v1978 = vsel %vm1973, %v1975, %v1977
        %v1981 = vadd.f32 %v606, %v1976
        %v1982 = vadd.f32 %v607, %v1978
        %v1986 = vrot.slane %v1286, 1
        %v1987 = vrot.slane %v1287, 1
        %v1988 = vsel %vm1973, %v1986, %v1987
        %v1989 = vrot.slane %v1288, 1
        %v1990 = vsel %vm1973, %v1987, %v1989
        %v1994 = vadd.f32 %v1059, %v1988
        %v1995 = vadd.f32 %v1060, %v1990
        %v1996 = vadd.f32 %v1061, %v1989
        %v2000 = vrot.slane %v1740, 1
        %v2001 = vrot.slane %v1741, 1
        %v2002 = vsel %vm1973, %v2000, %v2001
        %v2003 = vrot.slane %v1742, 1
        %v2004 = vsel %vm1973, %v2001, %v2003
        %v2008 = vadd.f32 %v1513, %v2002
        %v2009 = vadd.f32 %v1514, %v2004
        %v2010 = vadd.f32 %v1515, %v2003
        %vm2014 = vcmask 1045504
        %v2015 = vrot.slane %v1994, 2
        %v2016 = vrot.slane %v1995, 2
        %v2017 = vsel %vm2014, %v2015, %v2016
        %v2018 = vrot.slane %v1996, 2
        %v2019 = vsel %vm2014, %v2016, %v2018
        %v2022 = vadd.f32 %v1981, %v2017
        %v2023 = vadd.f32 %v1982, %v2019
        %v2027 = vrot.slane %v1967, 2
        %v2028 = vrot.slane %v1968, 2
        %v2029 = vsel %vm2014, %v2027, %v2028
        %v2030 = vrot.slane %v1969, 2
        %v2031 = vsel %vm2014, %v2028, %v2030
        %v2035 = vadd.f32 %v2008, %v2029
        %v2036 = vadd.f32 %v2009, %v2031
        %v2037 = vadd.f32 %v2010, %v2030
        %v2041 = vrot.slane %v2035, 4
        %v2042 = vrot.slane %v2036, 4
        %v2043 = vsel %vm176, %v2041, %v2042
        %v2044 = vrot.slane %v2037, 4
        %v2045 = vsel %vm176, %v2042, %v2044
        %v2048 = vadd.f32 %v2022, %v2043
        %v2049 = vadd.f32 %v2023, %v2045
        %v2050 = vmul.f32 %v2048, 0.5
        %v2051 = vmul.f32 %v2049, 0.5
        %v2052 = vtanh.pop %v2050
        %v2053 = vtanh.pop %v2051
        %v2054 = vmul.f32 %v2052, 0.5
        %v2055 = vmul.f32 %v2053, 0.5
        %v2056 = vadd.f32 %v2054, 0.5
        %v2057 = vadd.f32 %v2055, 0.5
        %v2058 = vlaneseq
        %vm2059 = vcmp.ge.s32.totalorder %v2058, 0
        %vm2060 = vcmp.lt.s32.totalorder %v2058, 16
        %vm2061 = vmand %vm2059, %vm2060
        %2062 = vst.msk [vmem:[#allocation4] sm:$0x1] %vm2061, %v2056
        %v2065 = vunpack.c.l.s4 1966171168
        %v2066 = vunpack.c.0.s8 %v2065
        %v2067 = vlaneseq
        %v2068 = vshrl.u32 %v2067, 7
        %v2069 = vsub.s32 %v2066, %v2068
        %v2070 = vrot.slane %v2056, %v2069
        %v2071 = vcombine.high %v2070, %v2070
        %v2073 = vunpack.c.l.s4 1966171168
        %v2074 = vunpack.c.0.s8 %v2073
        %v2075 = vlaneseq
        %v2076 = vshrl.u32 %v2075, 7
        %v2077 = vsub.s32 %v2074, %v2076
        %v2078 = vrot.slane %v2070, %v2077
        %v2080 = vunpack.c.l.s4 1966171168
        %v2081 = vunpack.c.0.s8 %v2080
        %v2082 = vlaneseq
        %v2083 = vshrl.u32 %v2082, 7
        %v2084 = vsub.s32 %v2081, %v2083
        %v2085 = vrot.slane %v2071, %v2084
        %2086 = vrot.lane.b32.xlu0 %v2085, 16
        %v2087 = vpop.permute.xlu0 %2086
        %vm2089 = vcmp.ge.s32.totalorder %v2058, 16
        %vm2090 = vcmp.lt.s32.totalorder %v2058, 32
        %vm2091 = vmand %vm2089, %vm2090
        %2092 = vst.msk [vmem:[#allocation4] sm:$0x1] %vm2091, %v2087
        %v2093 = vcombine.high %v2078, %v2078
        %2094 = vrot.lane.b32.xlu0 %v2093, 32
        %v2095 = vpop.permute.xlu0 %2094
        %vm2097 = vcmp.ge.s32.totalorder %v2058, 32
        %vm2098 = vcmp.lt.s32.totalorder %v2058, 48
        %vm2099 = vmand %vm2097, %vm2098
        %2100 = vst.msk [vmem:[#allocation4] sm:$0x1] %vm2099, %v2095
        %v2101 = vcombine.high %v2085, %v2085
        %2102 = vrot.lane.b32.xlu0 %v2101, 48
        %v2103 = vpop.permute.xlu0 %2102
        %vm2105 = vcmp.ge.s32.totalorder %v2058, 48
        %vm2106 = vcmp.lt.s32.totalorder %v2058, 64
        %vm2107 = vmand %vm2105, %vm2106
        %2108 = vst.msk [vmem:[#allocation4] sm:$0x1] %vm2107, %v2103
        %v2109 = vcombine.high %v2056, %v2056
        %v2111 = vunpack.c.l.s4 1966171168
        %v2112 = vunpack.c.0.s8 %v2111
        %v2113 = vlaneseq
        %v2114 = vshrl.u32 %v2113, 7
        %v2115 = vsub.s32 %v2112, %v2114
        %v2116 = vrot.slane %v2109, %v2115
        %v2118 = vunpack.c.l.s4 1966171168
        %v2119 = vunpack.c.0.s8 %v2118
        %v2120 = vlaneseq
        %v2121 = vshrl.u32 %v2120, 7
        %v2122 = vsub.s32 %v2119, %v2121
        %v2123 = vrot.slane %v2116, %v2122
        %2124 = vrot.lane.b32.xlu0 %v2123, 64
        %v2125 = vpop.permute.xlu0 %2124
        %vm2127 = vcmp.ge.s32.totalorder %v2058, 64
        %vm2128 = vcmp.lt.s32.totalorder %v2058, 80
        %vm2129 = vmand %vm2127, %vm2128
        %2130 = vst.msk [vmem:[#allocation4] sm:$0x1] %vm2129, %v2125
        %v2131 = vcombine.high %v2116, %v2116
        %v2133 = vunpack.c.l.s4 1966171168
        %v2134 = vunpack.c.0.s8 %v2133
        %v2135 = vlaneseq
        %v2136 = vshrl.u32 %v2135, 7
        %v2137 = vsub.s32 %v2134, %v2136
        %v2138 = vrot.slane %v2131, %v2137
        %2139 = vrot.lane.b32.xlu0 %v2138, 80
        %v2140 = vpop.permute.xlu0 %2139
        %vm2142 = vcmp.ge.s32.totalorder %v2058, 80
        %vm2143 = vcmp.lt.s32.totalorder %v2058, 96
        %vm2144 = vmand %vm2142, %vm2143
        %2145 = vst.msk [vmem:[#allocation4] sm:$0x1] %vm2144, %v2140
        %v2146 = vcombine.high %v2123, %v2123
        %2147 = vrot.lane.b32.xlu0 %v2146, 96
        %v2148 = vpop.permute.xlu0 %2147
        %vm2150 = vcmp.ge.s32.totalorder %v2058, 96
        %vm2151 = vcmp.lt.s32.totalorder %v2058, 112
        %vm2152 = vmand %vm2150, %vm2151
        %2153 = vst.msk [vmem:[#allocation4] sm:$0x1] %vm2152, %v2148
        %v2154 = vcombine.high %v2138, %v2138
        %2155 = vrot.lane.b32.xlu0 %v2154, 112
        %v2156 = vpop.permute.xlu0 %2155
        %vm2158 = vcmp.ge.s32.totalorder %v2058, 112
        %vm2159 = vcmp.lt.s32.totalorder %v2058, 128
        %vm2160 = vmand %vm2158, %vm2159
        %2161 = vst.msk [vmem:[#allocation4] sm:$0x1] %vm2160, %v2156
        %2162 = vst.msk [vmem:[#allocation4 + $0x1] sm:$0x1] %vm2061, %v2057
        %v2165 = vunpack.c.l.s4 1966171168
        %v2166 = vunpack.c.0.s8 %v2165
        %v2167 = vlaneseq
        %v2168 = vshrl.u32 %v2167, 7
        %v2169 = vsub.s32 %v2166, %v2168
        %v2170 = vrot.slane %v2057, %v2169
        %v2171 = vcombine.high %v2170, %v2170
        %v2173 = vunpack.c.l.s4 1966171168
        %v2174 = vunpack.c.0.s8 %v2173
        %v2175 = vlaneseq
        %v2176 = vshrl.u32 %v2175, 7
        %v2177 = vsub.s32 %v2174, %v2176
        %v2178 = vrot.slane %v2170, %v2177
        %v2180 = vunpack.c.l.s4 1966171168
        %v2181 = vunpack.c.0.s8 %v2180
        %v2182 = vlaneseq
        %v2183 = vshrl.u32 %v2182, 7
        %v2184 = vsub.s32 %v2181, %v2183
        %v2185 = vrot.slane %v2171, %v2184
        %2186 = vrot.lane.b32.xlu0 %v2185, 16
        %v2187 = vpop.permute.xlu0 %2186
        %2189 = vst.msk [vmem:[#allocation4 + $0x1] sm:$0x1] %vm2091, %v2187
        %v2190 = vcombine.high %v2178, %v2178
        %2191 = vrot.lane.b32.xlu0 %v2190, 32
        %v2192 = vpop.permute.xlu0 %2191
        %2194 = vst.msk [vmem:[#allocation4 + $0x1] sm:$0x1] %vm2099, %v2192
        %v2195 = vcombine.high %v2185, %v2185
        %2196 = vrot.lane.b32.xlu0 %v2195, 48
        %v2197 = vpop.permute.xlu0 %2196
        %2199 = vst.msk [vmem:[#allocation4 + $0x1] sm:$0x1] %vm2107, %v2197
        %v2200 = vcombine.high %v2057, %v2057
        %v2202 = vunpack.c.l.s4 1966171168
        %v2203 = vunpack.c.0.s8 %v2202
        %v2204 = vlaneseq
        %v2205 = vshrl.u32 %v2204, 7
        %v2206 = vsub.s32 %v2203, %v2205
        %v2207 = vrot.slane %v2200, %v2206
        %v2209 = vunpack.c.l.s4 1966171168
        %v2210 = vunpack.c.0.s8 %v2209
        %v2211 = vlaneseq
        %v2212 = vshrl.u32 %v2211, 7
        %v2213 = vsub.s32 %v2210, %v2212
        %v2214 = vrot.slane %v2207, %v2213
        %2215 = vrot.lane.b32.xlu0 %v2214, 64
        %v2216 = vpop.permute.xlu0 %2215
        %2218 = vst.msk [vmem:[#allocation4 + $0x1] sm:$0x1] %vm2129, %v2216
        %v2219 = vcombine.high %v2207, %v2207
        %v2221 = vunpack.c.l.s4 1966171168
        %v2222 = vunpack.c.0.s8 %v2221
        %v2223 = vlaneseq
        %v2224 = vshrl.u32 %v2223, 7
        %v2225 = vsub.s32 %v2222, %v2224
        %v2226 = vrot.slane %v2219, %v2225
        %2227 = vrot.lane.b32.xlu0 %v2226, 80
        %v2228 = vpop.permute.xlu0 %2227
        %2230 = vst.msk [vmem:[#allocation4 + $0x1] sm:$0x1] %vm2144, %v2228
        %v2231 = vcombine.high %v2214, %v2214
        %2232 = vrot.lane.b32.xlu0 %v2231, 96
        %v2233 = vpop.permute.xlu0 %2232
        %2235 = vst.msk [vmem:[#allocation4 + $0x1] sm:$0x1] %vm2152, %v2233
        %v2236 = vcombine.high %v2226, %v2226
        %2237 = vrot.lane.b32.xlu0 %v2236, 112
        %v2238 = vpop.permute.xlu0 %2237
        %2240 = vst.msk [vmem:[#allocation4 + $0x1] sm:$0x1] %vm2160, %v2238
        %v2241 = vld [vmem:[#allocation4] sm:$0x3]
        %v2243 = vlaneseq
        %v2244 = vshrl.u32 %v2243, 7
        %v2245 = vsub.s32 0, %v2244
        %v2246 = vrot.slane %v2241, %v2245
        %v2247 = vlaneseq
        %v2248 = vshrl.u32 %v2247, 7
        %v2249 = vsub.s32 1, %v2248
        %v2250 = vrot.slane %v2241, %v2249
        %v2251 = vcombine.low %v2246, %v2250
        %v2253 = vmul.f32 %v172, %v2251
        %2254 = vst [vmem:[%s171] sm:$0xff] %v2253
        %s2255 = sand.u32 %s75, 1
        %s2256 = scalar_lea.sflag [#allocation7], %s2255
        %s2257 = sand.u32 %s75, 1
        %s2258 = smul.addr %s2257, 8
        %s2259 = scalar_lea.vmem [#allocation10], %s2258
        // Predicated region
        $region37: #{tpu_custom_call.1} parent=27 // pred_check
          %p2260 = pneg %p85
        $region38: #{tpu_custom_call.1} parent=27 // pred_check_branch
          %2262 = sbr.rel (%p2260) target = $region40
        $region39: #{tpu_custom_call.1} parent=27 // pred_region
          %s2264 = ssub.s32 128, 128
          %2265 = vsyncadd %s2256, %s2264
          %s2266 = smul.addr %s20, 2
          %s2267 = smul.addr %s2266, 64
          %s2268 = scalar_lea.hbm %s2, %s2267
          %s2270 = sshll.u32 %s2259, 4
          %s2271 = int_to_ptr.vmem [resolvable:$true] %s2270
          %2273 = dma.vmem_to_hbm [thread:$0]  %s2271, 128, %s2268, %s2256
        $region40: #{tpu_custom_call.1} parent=27 // pred_fallthru
          _
      $region28: #{tpu_custom_call.1} parent=5 // pred_fallthru
        _
      %p2274 = scmp.le.s32.totalorder 2, %s15
      // Predicated region
      $region41: #{tpu_custom_call.1} parent=5 // pred_check
        %p2275 = pneg %p2274
      $region42: #{tpu_custom_call.1} parent=5 // pred_check_branch
        %2277 = sbr.rel (%p2275) target = $region44
      $region43: #{tpu_custom_call.1} parent=5 // pred_region
        %s2278 = ssub.s32 %s15, 2
        // Predicated region
        $region45: #{tpu_custom_call.1} parent=43 // pred_check
          %p2279 = pneg %p91
        $region46: #{tpu_custom_call.1} parent=43 // pred_check_branch
          %2281 = sbr.rel (%p2279) target = $region48
        $region47: #{tpu_custom_call.1} parent=43 // pred_region
          %s2282 = sand.u32 %s76, 1
          %s2283 = scalar_lea.sflag [#allocation7], %s2282
          %s2284 = sand.u32 %s76, 1
          %s2285 = smul.addr %s2284, 8
          %s2286 = scalar_lea.vmem [#allocation10], %s2285
          %2287 = dma.done %s2283, 128
        $region48: #{tpu_custom_call.1} parent=43 // pred_fallthru
          _
      $region44: #{tpu_custom_call.1} parent=5 // pred_fallthru
        _
    $region6: #{tpu_custom_call.1} parent=1 // loop_footer
      %s19 = sadd.s32 1, %s15
    $region7: #{tpu_custom_call.1} parent=1 // loop_footer_branch
      %14 = sbr.rel target = $region3
    $region8: #{tpu_custom_call.1} parent=1 // loop_exit
      _
    %2288 = vsyncpa [#allocation6], 1
    %s2289 = scalar_lea.sflag [#allocation6], 1
    %2290 = vsyncpa %s2289, 1
    %2291 = vsyncpa [#allocation7], 1
    %s2292 = scalar_lea.sflag [#allocation7], 1
    %2293 = vsyncpa %s2292, 1
    %2294 = vsyncpa [#allocation8], 1
    %s2295 = scalar_lea.sflag [#allocation8], 1
    %2296 = vsyncpa %s2295, 1

</llo_original>
